<compile_context>
chip_gen: v5e
topology: v5e:2x2
jax: 0.10.0
libtpu: 0.0.40
codegen_flags: <defaults>
</compile_context>

<pallas_src>
import jax
import jax.numpy as jnp
from jax.experimental import pallas as pl
from jax.experimental.pallas import tpu as pltpu

DIM_LATENT = 100
H1 = 256
H2 = 256
OUT = 784          # 28*28 -> kernel output width (no post-kernel column slice)

K_PAD = 128        # latent padded to one full 128-lane tile
OUT_PAD = 896      # 7*128: fc3 weight/bias padded -> lane-dense MXU passes
MAX_TILE_B = 1024  # fits under the raised scoped-VMEM limit on v5e/v6e/v7x


def _round_up(n, m):
    return -(-n // m) * m


def _generator_kernel(x_ref, w1_ref, b1_ref, w2_ref, b2_ref, w3_ref, b3_ref,
                      out_ref):
    # fc1 + relu  (bf16 operands, f32 MXU accumulation)
    h = jnp.dot(x_ref[...], w1_ref[...], preferred_element_type=jnp.float32)
    h = jnp.maximum(h + b1_ref[...], 0.0)

    # fc2 + relu
    h = jnp.dot(h.astype(jnp.bfloat16), w2_ref[...],
                preferred_element_type=jnp.float32)
    h = jnp.maximum(h + b2_ref[...], 0.0)

    # fc3 + tanh: compute at N = 896 (lane-dense MXU), store only the real
    # 784 columns so the wrapper never column-slices the HBM output again.
    h = jnp.dot(h.astype(jnp.bfloat16), w3_ref[...],
                preferred_element_type=jnp.float32)
    y = h + b3_ref[...]
    out_ref[...] = jnp.tanh(y[:, :OUT]).astype(out_ref.dtype)


def mnist_generator_forward(x, params, out_dtype=jnp.float32):
    """x: (B, 100) float32. Returns (B, 1, 28, 28) in `out_dtype` (f32 default)."""
    w1, b1, w2, b2, w3, b3 = params
    B, d_lat = x.shape

    # Batch tile: multiple of 16 rows (bf16 sublane packing), capped at 1024.
    # For B >= 32, force at least 2 grid steps so both v7x TensorCores are used
    # (HBM is shared, so splitting the batch costs nothing on the memory side).
    tile_b = min(MAX_TILE_B, _round_up(B, 16))
    if B >= 32:
        tile_b = min(tile_b, _round_up(-(-B // 2), 16))
    padded_b = _round_up(B, tile_b)

    # Zero-pad batch to a tile multiple and latent K to 128; bf16 operands.
    x_p = jnp.pad(x, ((0, padded_b - B), (0, K_PAD - d_lat))).astype(jnp.bfloat16)

    grid = (padded_b // tile_b,)

    flops = 2 * padded_b * (K_PAD * H1 + H1 * H2 + H2 * OUT_PAD)
    out_bytes = jnp.dtype(out_dtype).itemsize
    bytes_accessed = (
        x_p.size * 2
        + (w1.size + w2.size + w3.size) * 2
        + (b1.size + b2.size + b3.size) * 4
        + padded_b * OUT * out_bytes
    )

    out_flat = pl.pallas_call(
        _generator_kernel,
        out_shape=jax.ShapeDtypeStruct((padded_b, OUT), out_dtype),
        grid=grid,
        in_specs=[
            # activations: tiled along the batch grid axis
            pl.BlockSpec((tile_b, K_PAD), lambda i: (i, 0)),
            # weights / biases: constant index_map -> fetched once, VMEM-resident
            pl.BlockSpec((K_PAD, H1), lambda i: (0, 0)),
            pl.BlockSpec((1, H1), lambda i: (0, 0)),
            pl.BlockSpec((H1, H2), lambda i: (0, 0)),
            pl.BlockSpec((1, H2), lambda i: (0, 0)),
            pl.BlockSpec((H2, OUT_PAD), lambda i: (0, 0)),
            pl.BlockSpec((1, OUT_PAD), lambda i: (0, 0)),
        ],
        # Block last dim (784) == full array last dim -> legal, lane-dense-ish
        # stores (only the final 16-lane vreg per row group is masked).
        out_specs=pl.BlockSpec((tile_b, OUT), lambda i: (i, 0)),
        compiler_params=pltpu.CompilerParams(
            dimension_semantics=("parallel",),
            vmem_limit_bytes=48 * 1024 * 1024,
        ),
        cost_estimate=pl.CostEstimate(
            flops=flops,
            transcendentals=padded_b * OUT,
            bytes_accessed=bytes_accessed,
        ),
    )(x_p, w1, b1, w2, b2, w3, b3)

    return out_flat[:B, :].reshape(-1, 1, 28, 28)


def init_params(key):
    """Deterministic init matching nn.Linear fan-in bounds.

    Weights stored as padded (in_pad, out_pad) bf16, biases as (1, out_pad) f32.
    Padding rows/cols are zero, so the math matches the unpadded module.
    """
    true_in = [DIM_LATENT, H1, H2]
    true_out = [H1, H2, OUT]
    pad_in = [K_PAD, H1, H2]
    pad_out = [H1, H2, OUT_PAD]

    params = []
    for d_in, d_out, p_in, p_out in zip(true_in, true_out, pad_in, pad_out):
        kw, kb, key = jax.random.split(key, 3)
        bound = 1.0 / jnp.sqrt(d_in)
        w = jax.random.uniform(kw, (d_in, d_out), jnp.float32, -bound, bound)
        b = jax.random.uniform(kb, (1, d_out), jnp.float32, -bound, bound)
        w = jnp.pad(w, ((0, p_in - d_in), (0, p_out - d_out))).astype(jnp.bfloat16)
        b = jnp.pad(b, ((0, 0), (0, p_out - d_out)))
        params += [w, b]
    return tuple(params)


def _reference_forward(x, params):
    """Pure-JAX reference mirroring the kernel's bf16-operand / f32-accum math."""
    w1, b1, w2, b2, w3, b3 = params
    xb = jnp.pad(x, ((0, 0), (0, K_PAD - x.shape[1]))).astype(jnp.bfloat16)
    h = jnp.dot(xb, w1, preferred_element_type=jnp.float32)
    h = jnp.maximum(h + b1, 0.0)
    h = jnp.dot(h.astype(jnp.bfloat16), w2, preferred_element_type=jnp.float32)
    h = jnp.maximum(h + b2, 0.0)
    h = jnp.dot(h.astype(jnp.bfloat16), w3, preferred_element_type=jnp.float32)
    h = jnp.tanh(h + b3)
    return h[:, :OUT].reshape(-1, 1, 28, 28)


if __name__ == "__main__":
    key = jax.random.PRNGKey(0)
    k_x, k_p = jax.random.split(key)

    # batch=48 exercises the multi-step grid path (tile_b=32, grid=(2,), with
    # batch padding to 64) while staying small.
    batch = 48
    x = jax.random.normal(k_x, (batch, DIM_LATENT), dtype=jnp.float32)
    params = init_params(k_p)

    out = jax.block_until_ready(mnist_generator_forward(x, params))

    assert out.shape == (batch, 1, 28, 28), out.shape
    assert out.dtype == jnp.float32, out.dtype
    ref = _reference_forward(x, params)
    max_err = float(jnp.max(jnp.abs(out - ref)))
    assert jnp.allclose(out, ref, atol=2e-2, rtol=2e-2), max_err

    print("KERNEL_OK")
</pallas_src>

<mosaic_0001>
module attributes {stable_mosaic.version = 11 : i64} {
  func.func @_generator_kernel(%arg0: i32, %arg1: memref<32x128xbf16, #tpu.memory_space<vmem>>, %arg2: memref<128x256xbf16, #tpu.memory_space<vmem>>, %arg3: memref<1x256xf32, #tpu.memory_space<vmem>>, %arg4: memref<256x256xbf16, #tpu.memory_space<vmem>>, %arg5: memref<1x256xf32, #tpu.memory_space<vmem>>, %arg6: memref<256x896xbf16, #tpu.memory_space<vmem>>, %arg7: memref<1x896xf32, #tpu.memory_space<vmem>>, %arg8: memref<32x784xf32, #tpu.memory_space<vmem>>) attributes {dimension_semantics = [#tpu.dimension_semantics<parallel>], iteration_bounds = array<i64: 2>, scalar_prefetch = 0 : i64, scratch_operands = 0 : i64, tpu.core_type = #tpu.core_type<tc>, window_params = [{transform_indices = @transform_0, window_bounds = array<i64: 32, 128>}, {pipeline_mode = #tpu.pipeline_mode<synchronous>, transform_indices = @transform_1, window_bounds = array<i64: 128, 256>}, {pipeline_mode = #tpu.pipeline_mode<synchronous>, transform_indices = @transform_2, window_bounds = array<i64: 1, 256>}, {pipeline_mode = #tpu.pipeline_mode<synchronous>, transform_indices = @transform_3, window_bounds = array<i64: 256, 256>}, {pipeline_mode = #tpu.pipeline_mode<synchronous>, transform_indices = @transform_4, window_bounds = array<i64: 1, 256>}, {pipeline_mode = #tpu.pipeline_mode<synchronous>, transform_indices = @transform_5, window_bounds = array<i64: 256, 896>}, {pipeline_mode = #tpu.pipeline_mode<synchronous>, transform_indices = @transform_6, window_bounds = array<i64: 1, 896>}, {transform_indices = @transform_7, window_bounds = array<i64: 32, 784>}]} {
    %c0 = arith.constant 0 : index
    %c0_0 = arith.constant 0 : index
    %0 = vector.load %arg1[%c0, %c0_0] : memref<32x128xbf16, #tpu.memory_space<vmem>>, vector<32x128xbf16>
    %c0_1 = arith.constant 0 : index
    %c0_2 = arith.constant 0 : index
    %1 = vector.load %arg2[%c0_1, %c0_2] : memref<128x256xbf16, #tpu.memory_space<vmem>>, vector<128x256xbf16>
    %cst = arith.constant dense<0.000000e+00> : vector<32x256xf32>
    %2 = tpu.matmul %0, %1, %cst {dimension_numbers = #tpu.dot_dimension_numbers<[1], [0], [0], [1], [0, 0, 1, 1], [], []>} : vector<32x128xbf16>, vector<128x256xbf16>, vector<32x256xf32> -> vector<32x256xf32>
    %c0_3 = arith.constant 0 : index
    %c0_4 = arith.constant 0 : index
    %3 = vector.load %arg3[%c0_3, %c0_4] : memref<1x256xf32, #tpu.memory_space<vmem>>, vector<1x256xf32>
    %4 = vector.broadcast %3 : vector<1x256xf32> to vector<32x256xf32>
    %5 = arith.addf %2, %4 : vector<32x256xf32>
    %cst_5 = arith.constant 0.000000e+00 : f32
    %6 = vector.broadcast %cst_5 : f32 to vector<32x256xf32>
    %7 = arith.maximumf %5, %6 : vector<32x256xf32>
    %8 = arith.truncf %7 : vector<32x256xf32> to vector<32x256xbf16>
    %c0_6 = arith.constant 0 : index
    %c0_7 = arith.constant 0 : index
    %9 = vector.load %arg4[%c0_6, %c0_7] : memref<256x256xbf16, #tpu.memory_space<vmem>>, vector<256x256xbf16>
    %cst_8 = arith.constant dense<0.000000e+00> : vector<32x256xf32>
    %10 = tpu.matmul %8, %9, %cst_8 {dimension_numbers = #tpu.dot_dimension_numbers<[1], [0], [0], [1], [0, 0, 1, 1], [], []>} : vector<32x256xbf16>, vector<256x256xbf16>, vector<32x256xf32> -> vector<32x256xf32>
    %c0_9 = arith.constant 0 : index
    %c0_10 = arith.constant 0 : index
    %11 = vector.load %arg5[%c0_9, %c0_10] : memref<1x256xf32, #tpu.memory_space<vmem>>, vector<1x256xf32>
    %12 = vector.broadcast %11 : vector<1x256xf32> to vector<32x256xf32>
    %13 = arith.addf %10, %12 : vector<32x256xf32>
    %cst_11 = arith.constant 0.000000e+00 : f32
    %14 = vector.broadcast %cst_11 : f32 to vector<32x256xf32>
    %15 = arith.maximumf %13, %14 : vector<32x256xf32>
    %16 = arith.truncf %15 : vector<32x256xf32> to vector<32x256xbf16>
    %c0_12 = arith.constant 0 : index
    %c0_13 = arith.constant 0 : index
    %17 = vector.load %arg6[%c0_12, %c0_13] : memref<256x896xbf16, #tpu.memory_space<vmem>>, vector<256x896xbf16>
    %cst_14 = arith.constant dense<0.000000e+00> : vector<32x896xf32>
    %18 = tpu.matmul %16, %17, %cst_14 {dimension_numbers = #tpu.dot_dimension_numbers<[1], [0], [0], [1], [0, 0, 1, 1], [], []>} : vector<32x256xbf16>, vector<256x896xbf16>, vector<32x896xf32> -> vector<32x896xf32>
    %c0_15 = arith.constant 0 : index
    %c0_16 = arith.constant 0 : index
    %19 = vector.load %arg7[%c0_15, %c0_16] : memref<1x896xf32, #tpu.memory_space<vmem>>, vector<1x896xf32>
    %20 = vector.broadcast %19 : vector<1x896xf32> to vector<32x896xf32>
    %21 = arith.addf %18, %20 : vector<32x896xf32>
    %22 = vector.extract_strided_slice %21 {offsets = [0, 0], sizes = [32, 784], strides = [1, 1]} : vector<32x896xf32> to vector<32x784xf32>
    %23 = math.tanh %22 : vector<32x784xf32>
    %c0_17 = arith.constant 0 : index
    %c0_18 = arith.constant 0 : index
    %24 = vector.load %arg8[%c0_17, %c0_18] : memref<32x784xf32, #tpu.memory_space<vmem>>, vector<32x784xf32>
    tpu.vector_store %arg8[%c0_17, %c0_18], %23 {strides = array<i32>} : memref<32x784xf32, #tpu.memory_space<vmem>>, vector<32x784xf32>,
    return
  }
  func.func @transform_0(%arg0: i32) -> (i32, i32) {
    %c0_i32 = arith.constant 0 : i32
    %c0_i32_0 = arith.constant 0 : i32
    return %arg0, %c0_i32 : i32, i32
  }
  func.func @transform_1(%arg0: i32) -> (i32, i32) {
    %c0_i32 = arith.constant 0 : i32
    %c0_i32_0 = arith.constant 0 : i32
    %c0_i32_1 = arith.constant 0 : i32
    return %c0_i32, %c0_i32_0 : i32, i32
  }
  func.func @transform_2(%arg0: i32) -> (i32, i32) {
    %c0_i32 = arith.constant 0 : i32
    %c0_i32_0 = arith.constant 0 : i32
    %c0_i32_1 = arith.constant 0 : i32
    return %c0_i32, %c0_i32_0 : i32, i32
  }
  func.func @transform_3(%arg0: i32) -> (i32, i32) {
    %c0_i32 = arith.constant 0 : i32
    %c0_i32_0 = arith.constant 0 : i32
    %c0_i32_1 = arith.constant 0 : i32
    return %c0_i32, %c0_i32_0 : i32, i32
  }
  func.func @transform_4(%arg0: i32) -> (i32, i32) {
    %c0_i32 = arith.constant 0 : i32
    %c0_i32_0 = arith.constant 0 : i32
    %c0_i32_1 = arith.constant 0 : i32
    return %c0_i32, %c0_i32_0 : i32, i32
  }
  func.func @transform_5(%arg0: i32) -> (i32, i32) {
    %c0_i32 = arith.constant 0 : i32
    %c0_i32_0 = arith.constant 0 : i32
    %c0_i32_1 = arith.constant 0 : i32
    return %c0_i32, %c0_i32_0 : i32, i32
  }
  func.func @transform_6(%arg0: i32) -> (i32, i32) {
    %c0_i32 = arith.constant 0 : i32
    %c0_i32_0 = arith.constant 0 : i32
    %c0_i32_1 = arith.constant 0 : i32
    return %c0_i32, %c0_i32_0 : i32, i32
  }
  func.func @transform_7(%arg0: i32) -> (i32, i32) {
    %c0_i32 = arith.constant 0 : i32
    %c0_i32_0 = arith.constant 0 : i32
    return %arg0, %c0_i32 : i32, i32
  }
}

</mosaic_0001>

<llo_original>
// kernel: tpu_custom_call.1
$region0: #{tpu_custom_call.1}
  #allocation0 [shape = 'u32[]', space=smem, size = 0x4, offset = 0x4, fixed_abs, tag = 'smem constant byte address 0x4 - core index']
  #allocation1 [shape = 'u32[72,128]{1,0:T(1,128)}', space=vmem, size = 0x9000, scoped, tag = 'internal scratch']
  %s0 = inlined_call_operand.hbm [shape: bf16[64,128], index: 0, kind: input, shape index: {}]
  %s1 = inlined_call_operand.hbm [shape: bf16[128,256], index: 1, kind: input, shape index: {}]
  %s2 = inlined_call_operand.hbm [shape: f32[1,256], index: 2, kind: input, shape index: {}]
  %s3 = inlined_call_operand.hbm [shape: bf16[256,256], index: 3, kind: input, shape index: {}]
  %s4 = inlined_call_operand.vmem [shape: f32[1,256], index: 4, kind: input, shape index: {}]
  %s5 = inlined_call_operand.hbm [shape: bf16[256,896], index: 5, kind: input, shape index: {}]
  %s6 = inlined_call_operand.hbm [shape: f32[1,896], index: 6, kind: input, shape index: {}]
  %s7 = inlined_call_operand.hbm [shape: f32[64,784], index: 7, kind: output, shape index: {}]
  %s8 = sld [smem:[#allocation0]]
  $region85: #{tpu_custom_call.1} parent=0
    _
  %s10 = ssub.s32 1, %s8
  %s11 = scalar_select 0, %s10, %s8
  $region1: #{tpu_custom_call.1} parent=0
    #allocation2 [shape = 'u8[16384]{0}', space=vmem, size = 0x4000, scoped, tag = 'input window, operand 0']
    #allocation3 [shape = 's32[2]{0}', space=sflag, size = 0x8, scoped, tag = 'scoped memory for tpu_custom_call.1']
    #allocation4 [shape = 's32[2]{0}', space=sflag, size = 0x8, scoped, tag = 'scoped memory for tpu_custom_call.1']
    #allocation5 [shape = 'u8[65536]{0}', space=vmem, size = 0x10000, scoped, tag = 'input window, operand 1, single buffered']
    #allocation6 [shape = 's32[1]{0}', space=sflag, size = 0x4, scoped, tag = 'scoped memory for tpu_custom_call.1']
    #allocation7 [shape = 'u8[1024]{0}', space=vmem, size = 0x400, scoped, tag = 'input window, operand 2, single buffered']
    #allocation8 [shape = 'u8[131072]{0}', space=vmem, size = 0x20000, scoped, tag = 'input window, operand 3, single buffered']
    #allocation9 [shape = 's32[1]{0}', space=sflag, size = 0x4, scoped, tag = 'scoped memory for tpu_custom_call.1']
    #allocation10 [shape = 'u8[458752]{0}', space=vmem, size = 0x70000, scoped, tag = 'input window, operand 5, single buffered']
    #allocation11 [shape = 'u8[3584]{0}', space=vmem, size = 0x1000, scoped, tag = 'input window, operand 6, single buffered']
    #allocation12 [shape = 's32[1]{0}', space=sflag, size = 0x4, scoped, tag = 'scoped memory for tpu_custom_call.1']
    #allocation13 [shape = 'u8[229376]{0}', space=vmem, size = 0x38000, scoped, tag = 'output window, operand 0']
    %12 = vsyncpa [#allocation3], 0
    %s13 = scalar_lea.sflag [#allocation3], 1
    %14 = vsyncpa %s13, 0
    %15 = vsyncpa [#allocation6], 0
    %16 = vsyncpa [#allocation9], 0
    %17 = vsyncpa [#allocation12], 0
    %18 = vsyncpa [#allocation4], 0
    %s19 = scalar_lea.sflag [#allocation4], 1
    %20 = vsyncpa %s19, 0
    loop: start=0, step=1, limit=4
    $region2: #{tpu_custom_call.1} parent=1 // loop_pre_header
      _
    $region3: #{tpu_custom_call.1} parent=1 // loop_header
      %s22 = sphi 0, %s26
      %p23 = scmp.ge.s32.totalorder %s22, 4
      %s32 = sphi 0, %s34
      %s35 = sphi 0, %s32
      %s36 = sphi 0, %s35
      %s52 = sphi 0, %s36
      %s56 = sphi 0, %s56
      %s58 = sphi 0, %s56
      %s59 = sphi 0, %s58
      %s73 = sphi 0, %s59
      %s77 = sphi 0, %s77
      %s79 = sphi 0, %s77
      %s80 = sphi 0, %s79
      %s94 = sphi 0, %s80
      %s98 = sphi 0, %s98
      %s100 = sphi 0, %s98
      %s101 = sphi 0, %s100
      %s115 = sphi 0, %s101
      %s119 = sphi 0, %s119
      %s121 = sphi 0, %s119
      %s122 = sphi 0, %s121
      %s136 = sphi 0, %s122
      %s140 = sphi 0, %s140
      %s142 = sphi 0, %s140
      %s143 = sphi 0, %s142
      %s157 = sphi 0, %s143
      %s161 = sphi 0, %s161
      %s163 = sphi 0, %s161
      %s164 = sphi 0, %s163
      %s178 = sphi 0, %s164
      %s184 = sphi 0, %s186
      %s187 = sphi 0, %s184
      %s188 = sphi 0, %s187
      %s204 = sphi 0, %s188
    $region4: #{tpu_custom_call.1} parent=1 // loop_header_branch
      %25 = sbr.rel (%p23) target = $region8
    $region5: #{tpu_custom_call.1} parent=1 // loop_body
      %s27 = ssub.s32 %s22, 1
      %s28 = ssub.s32 %s22, 2
      %s29 = sadd.s32 %s22, 1
      %s30 = ssub.s32 %s22, %s29
      %p31 = scmp.eq.s32.totalorder %s30, 0
      %s33 = sadd.s32 %s32, 1
      %s34 = scalar_select %p31, %s32, %s33
      %p37 = pneg %p31
      %p38 = scmp.eq.s32.totalorder %s22, 1
      %p39 = por %p37, %p38
      %p40 = scmp.ne.s32.totalorder %s32, %s35
      %p41 = scmp.eq.s32.totalorder %s22, 0
      %p42 = por %p40, %p41
      %p43 = scmp.ne.s32.totalorder %s32, %s35
      %p44 = scmp.eq.s32.totalorder %s27, 1
      %p45 = por %p43, %p44
      %p46 = scmp.ne.s32.totalorder %s35, %s36
      %p47 = scmp.eq.s32.totalorder %s27, 0
      %p48 = por %p46, %p47
      %p49 = scmp.ne.s32.totalorder %s35, %s36
      %p50 = scmp.eq.s32.totalorder %s28, 1
      %p51 = por %p49, %p50
      %p53 = scmp.ne.s32.totalorder %s36, %s52
      %p54 = scmp.eq.s32.totalorder %s28, 0
      %p55 = por %p53, %p54
      %s57 = sadd.s32 %s56, 1
      %p60 = scmp.eq.s32.totalorder %s22, 1
      %p61 = scmp.ne.s32.totalorder %s56, %s58
      %p62 = scmp.eq.s32.totalorder %s22, 0
      %p63 = por %p61, %p62
      %p64 = scmp.ne.s32.totalorder %s56, %s58
      %p65 = scmp.eq.s32.totalorder %s27, 1
      %p66 = por %p64, %p65
      %p67 = scmp.ne.s32.totalorder %s58, %s59
      %p68 = scmp.eq.s32.totalorder %s27, 0
      %p69 = por %p67, %p68
      %p70 = scmp.ne.s32.totalorder %s58, %s59
      %p71 = scmp.eq.s32.totalorder %s28, 1
      %p72 = por %p70, %p71
      %p74 = scmp.ne.s32.totalorder %s59, %s73
      %p75 = scmp.eq.s32.totalorder %s28, 0
      %p76 = por %p74, %p75
      %s78 = sadd.s32 %s77, 1
      %p81 = scmp.eq.s32.totalorder %s22, 1
      %p82 = scmp.ne.s32.totalorder %s77, %s79
      %p83 = scmp.eq.s32.totalorder %s22, 0
      %p84 = por %p82, %p83
      %p85 = scmp.ne.s32.totalorder %s77, %s79
      %p86 = scmp.eq.s32.totalorder %s27, 1
      %p87 = por %p85, %p86
      %p88 = scmp.ne.s32.totalorder %s79, %s80
      %p89 = scmp.eq.s32.totalorder %s27, 0
      %p90 = por %p88, %p89
      %p91 = scmp.ne.s32.totalorder %s79, %s80
      %p92 = scmp.eq.s32.totalorder %s28, 1
      %p93 = por %p91, %p92
      %p95 = scmp.ne.s32.totalorder %s80, %s94
      %p96 = scmp.eq.s32.totalorder %s28, 0
      %p97 = por %p95, %p96
      %s99 = sadd.s32 %s98, 1
      %p102 = scmp.eq.s32.totalorder %s22, 1
      %p103 = scmp.ne.s32.totalorder %s98, %s100
      %p104 = scmp.eq.s32.totalorder %s22, 0
      %p105 = por %p103, %p104
      %p106 = scmp.ne.s32.totalorder %s98, %s100
      %p107 = scmp.eq.s32.totalorder %s27, 1
      %p108 = por %p106, %p107
      %p109 = scmp.ne.s32.totalorder %s100, %s101
      %p110 = scmp.eq.s32.totalorder %s27, 0
      %p111 = por %p109, %p110
      %p112 = scmp.ne.s32.totalorder %s100, %s101
      %p113 = scmp.eq.s32.totalorder %s28, 1
      %p114 = por %p112, %p113
      %p116 = scmp.ne.s32.totalorder %s101, %s115
      %p117 = scmp.eq.s32.totalorder %s28, 0
      %p118 = por %p116, %p117
      %s120 = sadd.s32 %s119, 1
      %p123 = scmp.eq.s32.totalorder %s22, 1
      %p124 = scmp.ne.s32.totalorder %s119, %s121
      %p125 = scmp.eq.s32.totalorder %s22, 0
      %p126 = por %p124, %p125
      %p127 = scmp.ne.s32.totalorder %s119, %s121
      %p128 = scmp.eq.s32.totalorder %s27, 1
      %p129 = por %p127, %p128
      %p130 = scmp.ne.s32.totalorder %s121, %s122
      %p131 = scmp.eq.s32.totalorder %s27, 0
      %p132 = por %p130, %p131
      %p133 = scmp.ne.s32.totalorder %s121, %s122
      %p134 = scmp.eq.s32.totalorder %s28, 1
      %p135 = por %p133, %p134
      %p137 = scmp.ne.s32.totalorder %s122, %s136
      %p138 = scmp.eq.s32.totalorder %s28, 0
      %p139 = por %p137, %p138
      %s141 = sadd.s32 %s140, 1
      %p144 = scmp.eq.s32.totalorder %s22, 1
      %p145 = scmp.ne.s32.totalorder %s140, %s142
      %p146 = scmp.eq.s32.totalorder %s22, 0
      %p147 = por %p145, %p146
      %p148 = scmp.ne.s32.totalorder %s140, %s142
      %p149 = scmp.eq.s32.totalorder %s27, 1
      %p150 = por %p148, %p149
      %p151 = scmp.ne.s32.totalorder %s142, %s143
      %p152 = scmp.eq.s32.totalorder %s27, 0
      %p153 = por %p151, %p152
      %p154 = scmp.ne.s32.totalorder %s142, %s143
      %p155 = scmp.eq.s32.totalorder %s28, 1
      %p156 = por %p154, %p155
      %p158 = scmp.ne.s32.totalorder %s143, %s157
      %p159 = scmp.eq.s32.totalorder %s28, 0
      %p160 = por %p158, %p159
      %s162 = sadd.s32 %s161, 1
      %p165 = scmp.eq.s32.totalorder %s22, 1
      %p166 = scmp.ne.s32.totalorder %s161, %s163
      %p167 = scmp.eq.s32.totalorder %s22, 0
      %p168 = por %p166, %p167
      %p169 = scmp.ne.s32.totalorder %s161, %s163
      %p170 = scmp.eq.s32.totalorder %s27, 1
      %p171 = por %p169, %p170
      %p172 = scmp.ne.s32.totalorder %s163, %s164
      %p173 = scmp.eq.s32.totalorder %s27, 0
      %p174 = por %p172, %p173
      %p175 = scmp.ne.s32.totalorder %s163, %s164
      %p176 = scmp.eq.s32.totalorder %s28, 1
      %p177 = por %p175, %p176
      %p179 = scmp.ne.s32.totalorder %s164, %s178
      %p180 = scmp.eq.s32.totalorder %s28, 0
      %p181 = por %p179, %p180
      %s182 = ssub.s32 %s22, %s29
      %p183 = scmp.eq.s32.totalorder %s182, 0
      %s185 = sadd.s32 %s184, 1
      %s186 = scalar_select %p183, %s184, %s185
      %p189 = pneg %p183
      %p190 = scmp.eq.s32.totalorder %s22, 1
      %p191 = por %p189, %p190
      %p192 = scmp.ne.s32.totalorder %s184, %s187
      %p193 = scmp.eq.s32.totalorder %s22, 0
      %p194 = por %p192, %p193
      %p195 = scmp.ne.s32.totalorder %s184, %s187
      %p196 = scmp.eq.s32.totalorder %s27, 1
      %p197 = por %p195, %p196
      %p198 = scmp.ne.s32.totalorder %s187, %s188
      %p199 = scmp.eq.s32.totalorder %s27, 0
      %p200 = por %p198, %p199
      %p201 = scmp.ne.s32.totalorder %s187, %s188
      %p202 = scmp.eq.s32.totalorder %s28, 1
      %p203 = por %p201, %p202
      %p205 = scmp.ne.s32.totalorder %s188, %s204
      %p206 = scmp.eq.s32.totalorder %s28, 0
      %p207 = por %p205, %p206
      %p208 = scmp.le.s32.totalorder 1, %s22
      %p209 = scmp.lt.s32.totalorder %s22, 3
      %p210 = pnand %p208, %p209
      %p211 = pneg %p210
      // Predicated region
      $region9: #{tpu_custom_call.1} parent=5 // pred_check
        _
      $region10: #{tpu_custom_call.1} parent=5 // pred_check_branch
        %213 = sbr.rel (%p210) target = $region12
      $region11: #{tpu_custom_call.1} parent=5 // pred_region
        %s214 = ssub.s32 %s22, 1
        // Predicated region
        $region13: #{tpu_custom_call.1} parent=11 // pred_check
          %p215 = pneg %p69
        $region14: #{tpu_custom_call.1} parent=11 // pred_check_branch
          %217 = sbr.rel (%p215) target = $region16
        $region15: #{tpu_custom_call.1} parent=11 // pred_region
          %219 = vsyncadd [#allocation6], 0
          %s220 = sshll.u32 %s1, 4
          %s221 = int_to_ptr.hbm [resolvable:$true] %s220
          %s222 = sshll.u32 [#allocation5], 4
          %s223 = int_to_ptr.vmem [resolvable:$true] %s222
          %228 = dma.hbm_to_vmem [thread:$0]  %s221, 2048, %s223, [#allocation6], 128, 128, 8
        $region16: #{tpu_custom_call.1} parent=11 // pred_fallthru
          _
        // Predicated region
        $region17: #{tpu_custom_call.1} parent=11 // pred_check
          %p229 = pneg %p90
        $region18: #{tpu_custom_call.1} parent=11 // pred_check_branch
          %231 = sbr.rel (%p229) target = $region20
        $region19: #{tpu_custom_call.1} parent=11 // pred_region
          %233 = vsyncadd [#allocation6], 0
          %s235 = sshll.u32 %s2, 4
          %s236 = int_to_ptr.hbm [resolvable:$true] %s235
          %s237 = sshll.u32 [#allocation7], 4
          %s238 = int_to_ptr.vmem [resolvable:$true] %s237
          %240 = dma.hbm_to_vmem [thread:$0]  %s236, 32, %s238, [#allocation6]
        $region20: #{tpu_custom_call.1} parent=11 // pred_fallthru
          _
        // Predicated region
        $region21: #{tpu_custom_call.1} parent=11 // pred_check
          %p241 = pneg %p111
        $region22: #{tpu_custom_call.1} parent=11 // pred_check_branch
          %243 = sbr.rel (%p241) target = $region24
        $region23: #{tpu_custom_call.1} parent=11 // pred_region
          %245 = vsyncadd [#allocation9], 0
          %s246 = sshll.u32 %s3, 4
          %s247 = int_to_ptr.hbm [resolvable:$true] %s246
          %s248 = sshll.u32 [#allocation8], 4
          %s249 = int_to_ptr.vmem [resolvable:$true] %s248
          %254 = dma.hbm_to_vmem [thread:$0]  %s247, 4096, %s249, [#allocation9], 128, 128, 8
        $region24: #{tpu_custom_call.1} parent=11 // pred_fallthru
          _
        // Predicated region
        $region25: #{tpu_custom_call.1} parent=11 // pred_check
          %p255 = pneg %p132
        $region26: #{tpu_custom_call.1} parent=11 // pred_check_branch
          %257 = sbr.rel (%p255) target = $region28
        $region27: #{tpu_custom_call.1} parent=11 // pred_region
          _
        $region28: #{tpu_custom_call.1} parent=11 // pred_fallthru
          _
        // Predicated region
        $region29: #{tpu_custom_call.1} parent=11 // pred_check
          %p258 = pneg %p153
        $region30: #{tpu_custom_call.1} parent=11 // pred_check_branch
          %260 = sbr.rel (%p258) target = $region32
        $region31: #{tpu_custom_call.1} parent=11 // pred_region
          %262 = vsyncadd [#allocation9], 0
          %s263 = sshll.u32 %s5, 4
          %s264 = int_to_ptr.hbm [resolvable:$true] %s263
          %s265 = sshll.u32 [#allocation10], 4
          %s266 = int_to_ptr.vmem [resolvable:$true] %s265
          %271 = dma.hbm_to_vmem [thread:$0]  %s264, 14336, %s266, [#allocation9], 448, 448, 28
        $region32: #{tpu_custom_call.1} parent=11 // pred_fallthru
          _
        // Predicated region
        $region33: #{tpu_custom_call.1} parent=11 // pred_check
          %p272 = pneg %p174
        $region34: #{tpu_custom_call.1} parent=11 // pred_check_branch
          %274 = sbr.rel (%p272) target = $region36
        $region35: #{tpu_custom_call.1} parent=11 // pred_region
          %276 = vsyncadd [#allocation12], 0
          %s278 = sshll.u32 %s6, 4
          %s279 = int_to_ptr.hbm [resolvable:$true] %s278
          %s280 = sshll.u32 [#allocation11], 4
          %s281 = int_to_ptr.vmem [resolvable:$true] %s280
          %283 = dma.hbm_to_vmem [thread:$0]  %s279, 112, %s281, [#allocation12]
        $region36: #{tpu_custom_call.1} parent=11 // pred_fallthru
          _
      $region12: #{tpu_custom_call.1} parent=5 // pred_fallthru
        _
      %p284 = scmp.lt.s32.totalorder %s22, 2
      // Predicated region
      $region37: #{tpu_custom_call.1} parent=5 // pred_check
        %p285 = pneg %p284
      $region38: #{tpu_custom_call.1} parent=5 // pred_check_branch
        %287 = sbr.rel (%p285) target = $region40
      $region39: #{tpu_custom_call.1} parent=5 // pred_region
        // Predicated region
        $region41: #{tpu_custom_call.1} parent=39 // pred_check
          %p288 = pneg %p42
        $region42: #{tpu_custom_call.1} parent=39 // pred_check_branch
          %290 = sbr.rel (%p288) target = $region44
        $region43: #{tpu_custom_call.1} parent=39 // pred_region
          %s291 = sand.u32 %s32, 1
          %s292 = scalar_lea.sflag [#allocation3], %s291
          %s293 = sand.u32 %s32, 1
          %s294 = smul.addr %s293, 16
          %s295 = scalar_lea.vmem [#allocation2], %s294
          %s296 = smul.u32 4, %s22
          %298 = vsyncadd %s292, 0
          %s299 = smul.addr %s296, 4
          %s300 = scalar_lea.hbm %s0, %s299
          %s301 = sshll.u32 %s300, 4
          %s302 = int_to_ptr.hbm [resolvable:$true] %s301
          %s303 = sshll.u32 %s295, 4
          %s304 = int_to_ptr.vmem [resolvable:$true] %s303
          %309 = dma.hbm_to_vmem [thread:$0]  %s302, 256, %s304, %s292, 64, 64, 4
        $region44: #{tpu_custom_call.1} parent=39 // pred_fallthru
          _
      $region40: #{tpu_custom_call.1} parent=5 // pred_fallthru
        _
      %p310 = scmp.le.s32.totalorder 1, %s22
      %p311 = scmp.lt.s32.totalorder %s22, 3
      %p312 = pnand %p310, %p311
      %p313 = pneg %p312
      // Predicated region
      $region45: #{tpu_custom_call.1} parent=5 // pred_check
        _
      $region46: #{tpu_custom_call.1} parent=5 // pred_check_branch
        %315 = sbr.rel (%p312) target = $region48
      $region47: #{tpu_custom_call.1} parent=5 // pred_region
        %s316 = ssub.s32 %s22, 1
        %s317 = sand.u32 %s35, 1
        %s318 = scalar_lea.sflag [#allocation3], %s317
        %s319 = sand.u32 %s35, 1
        %s320 = smul.addr %s319, 16
        %s321 = scalar_lea.vmem [#allocation2], %s320
        // Predicated region
        $region49: #{tpu_custom_call.1} parent=47 // pred_check
          %p322 = pneg %p48
        $region50: #{tpu_custom_call.1} parent=47 // pred_check_branch
          %324 = sbr.rel (%p322) target = $region52
        $region51: #{tpu_custom_call.1} parent=47 // pred_region
          %326 = dma.done %s318, 256
        $region52: #{tpu_custom_call.1} parent=47 // pred_fallthru
          _
        // Predicated region
        $region53: #{tpu_custom_call.1} parent=47 // pred_check
          %p327 = pneg %p69
        $region54: #{tpu_custom_call.1} parent=47 // pred_check_branch
          %329 = sbr.rel (%p327) target = $region56
        $region55: #{tpu_custom_call.1} parent=47 // pred_region
          %331 = dma.done [#allocation6], 2048
        $region56: #{tpu_custom_call.1} parent=47 // pred_fallthru
          _
        // Predicated region
        $region57: #{tpu_custom_call.1} parent=47 // pred_check
          %p332 = pneg %p90
        $region58: #{tpu_custom_call.1} parent=47 // pred_check_branch
          %334 = sbr.rel (%p332) target = $region60
        $region59: #{tpu_custom_call.1} parent=47 // pred_region
          %336 = dma.done [#allocation6], 32
        $region60: #{tpu_custom_call.1} parent=47 // pred_fallthru
          _
        // Predicated region
        $region61: #{tpu_custom_call.1} parent=47 // pred_check
          %p337 = pneg %p111
        $region62: #{tpu_custom_call.1} parent=47 // pred_check_branch
          %339 = sbr.rel (%p337) target = $region64
        $region63: #{tpu_custom_call.1} parent=47 // pred_region
          %341 = dma.done [#allocation9], 4096
        $region64: #{tpu_custom_call.1} parent=47 // pred_fallthru
          _
        // Predicated region
        $region65: #{tpu_custom_call.1} parent=47 // pred_check
          %p342 = pneg %p153
        $region66: #{tpu_custom_call.1} parent=47 // pred_check_branch
          %344 = sbr.rel (%p342) target = $region68
        $region67: #{tpu_custom_call.1} parent=47 // pred_region
          %346 = dma.done [#allocation9], 14336
        $region68: #{tpu_custom_call.1} parent=47 // pred_fallthru
          _
        // Predicated region
        $region69: #{tpu_custom_call.1} parent=47 // pred_check
          %p347 = pneg %p174
        $region70: #{tpu_custom_call.1} parent=47 // pred_check_branch
          %349 = sbr.rel (%p347) target = $region72
        $region71: #{tpu_custom_call.1} parent=47 // pred_region
          %351 = dma.done [#allocation12], 112
        $region72: #{tpu_custom_call.1} parent=47 // pred_fallthru
          _
        %s352 = sand.u32 %s35, 1
        %s353 = scalar_lea.sflag [#allocation3], %s352
        %s354 = sand.u32 %s35, 1
        %s355 = smul.addr %s354, 16
        %s356 = scalar_lea.vmem [#allocation2], %s355
        %p357 = pneg %p48
        %p358 = pneg %p45
        %p359 = pneg %p69
        %p360 = pneg %p66
        %p361 = pneg %p90
        %p362 = pneg %p87
        %p363 = pneg %p111
        %p364 = pneg %p108
        %p365 = pneg %p132
        %p366 = pneg %p129
        %p367 = pneg %p153
        %p368 = pneg %p150
        %p369 = pneg %p174
        %p370 = pneg %p171
        %p371 = pneg %p200
        %p372 = pneg %p197
        %s373 = sand.u32 %s187, 1
        %s374 = scalar_lea.sflag [#allocation4], %s373
        %s375 = sand.u32 %s187, 1
        %s376 = smul.addr %s375, 224
        %s377 = scalar_lea.vmem [#allocation13], %s376
        %s378 = smul.u32 4, %s27
        %s379 = smul.u32 4, %s27
        %v380 = vld [vmem:[%s321] sm:$0xf]
        %v381 = vld [vmem:[%s321 + $0x4] sm:$0xf]
        %v382 = vld [vmem:[%s321 + $0x8] sm:$0xf]
        %v383 = vld [vmem:[%s321 + $0xc] sm:$0xf]
        %v384 = vld [vmem:[#allocation5] sm:$0xff]
        %v385 = vld [vmem:[#allocation5 + $0x8] sm:$0xff]
        %v386 = vld [vmem:[#allocation5 + $0x10] sm:$0xff]
        %v387 = vld [vmem:[#allocation5 + $0x18] sm:$0xff]
        %v388 = vld [vmem:[#allocation5 + $0x20] sm:$0xff]
        %v389 = vld [vmem:[#allocation5 + $0x28] sm:$0xff]
        %v390 = vld [vmem:[#allocation5 + $0x30] sm:$0xff]
        %v391 = vld [vmem:[#allocation5 + $0x38] sm:$0xff]
        %v392 = vld [vmem:[#allocation5 + $0x40] sm:$0xff]
        %v393 = vld [vmem:[#allocation5 + $0x48] sm:$0xff]
        %v394 = vld [vmem:[#allocation5 + $0x50] sm:$0xff]
        %v395 = vld [vmem:[#allocation5 + $0x58] sm:$0xff]
        %v396 = vld [vmem:[#allocation5 + $0x60] sm:$0xff]
        %v397 = vld [vmem:[#allocation5 + $0x68] sm:$0xff]
        %v398 = vld [vmem:[#allocation5 + $0x70] sm:$0xff]
        %v399 = vld [vmem:[#allocation5 + $0x78] sm:$0xff]
        %v400 = vld [vmem:[#allocation7] sm:$0x3]
        %v402 = vperm.slane %v400, 0
        %v403 = vperm.slane %v400, 1
        %v410 = vunpack.c.l.b16 %v380
        %v411 = vunpack.c.l.b16 %v381
        %v412 = vunpack.c.l.b16 %v382
        %v413 = vunpack.c.l.b16 %v383
        %v414 = vpack.c.b16 %v411, %v410
        %v415 = vpack.c.b16 %v413, %v412
        %v434 = vunpack.c.l.b16 %v384
        %v435 = vunpack.c.h.b16 %v384
        %v436 = vunpack.c.l.b16 %v385
        %v437 = vunpack.c.h.b16 %v385
        %v438 = vunpack.c.l.b16 %v386
        %v439 = vunpack.c.h.b16 %v386
        %v440 = vunpack.c.l.b16 %v387
        %v441 = vunpack.c.h.b16 %v387
        %v442 = vunpack.c.l.b16 %v388
        %v443 = vunpack.c.h.b16 %v388
        %v444 = vunpack.c.l.b16 %v389
        %v445 = vunpack.c.h.b16 %v389
        %v446 = vunpack.c.l.b16 %v390
        %v447 = vunpack.c.h.b16 %v390
        %v448 = vunpack.c.l.b16 %v391
        %v449 = vunpack.c.h.b16 %v391
        %v450 = vunpack.c.l.b16 %v392
        %v451 = vunpack.c.h.b16 %v392
        %v452 = vunpack.c.l.b16 %v393
        %v453 = vunpack.c.h.b16 %v393
        %v454 = vunpack.c.l.b16 %v394
        %v455 = vunpack.c.h.b16 %v394
        %v456 = vunpack.c.l.b16 %v395
        %v457 = vunpack.c.h.b16 %v395
        %v458 = vunpack.c.l.b16 %v396
        %v459 = vunpack.c.h.b16 %v396
        %v460 = vunpack.c.l.b16 %v397
        %v461 = vunpack.c.h.b16 %v397
        %v462 = vunpack.c.l.b16 %v398
        %v463 = vunpack.c.h.b16 %v398
        %v464 = vunpack.c.l.b16 %v399
        %v465 = vunpack.c.h.b16 %v399
        %v466 = vpack.c.b16 %v436, %v434
        %v467 = vpack.c.b16 %v437, %v435
        %v468 = vpack.c.b16 %v440, %v438
        %v469 = vpack.c.b16 %v441, %v439
        %v470 = vpack.c.b16 %v444, %v442
        %v471 = vpack.c.b16 %v445, %v443
        %v472 = vpack.c.b16 %v448, %v446
        %v473 = vpack.c.b16 %v449, %v447
        %v474 = vpack.c.b16 %v452, %v450
        %v475 = vpack.c.b16 %v453, %v451
        %v476 = vpack.c.b16 %v456, %v454
        %v477 = vpack.c.b16 %v457, %v455
        %v478 = vpack.c.b16 %v460, %v458
        %v479 = vpack.c.b16 %v461, %v459
        %v480 = vpack.c.b16 %v464, %v462
        %v481 = vpack.c.b16 %v465, %v463
        %498 = vmatpush.bf16.msra.mxu0 %v480
        %499 = vmatpush.bf16.msra.mxu0 %v478
        %500 = vmatpush.bf16.msra.mxu0 %v476
        %501 = vmatpush.bf16.msra.mxu0 %v474
        %502 = vmatpush.bf16.msra.mxu0 %v472
        %503 = vmatpush.bf16.msra.mxu0 %v470
        %504 = vmatpush.bf16.msra.mxu0 %v468
        %505 = vmatpush.bf16.msra.mxu0 %v466
        %506 = vmatmul.bf16.gmra.mxu0 %v414
        %v507 = vpop.f32.mrf.mxu0
        %v508 = vadd.f32 %v402, %v507
        %v509 = vpop.f32.mrf.mxu0
        %v510 = vadd.f32 %v402, %v509
        %511 = vmatmul.bf16.gmra.mxu0 %v415
        %v512 = vpop.f32.mrf.mxu0
        %v513 = vadd.f32 %v402, %v512
        %v514 = vpop.f32.mrf.mxu0
        %v515 = vadd.f32 %v402, %v514
        %516 = vdwg.mxu0
        %517 = vmatpush.bf16.msra.mxu0 %v481
        %518 = vmatpush.bf16.msra.mxu0 %v479
        %519 = vmatpush.bf16.msra.mxu0 %v477
        %520 = vmatpush.bf16.msra.mxu0 %v475
        %521 = vmatpush.bf16.msra.mxu0 %v473
        %522 = vmatpush.bf16.msra.mxu0 %v471
        %523 = vmatpush.bf16.msra.mxu0 %v469
        %524 = vmatpush.bf16.msra.mxu0 %v467
        %525 = vmatmul.bf16.gmra.mxu0 %v414
        %v526 = vpop.f32.mrf.mxu0
        %v527 = vadd.f32 %v403, %v526
        %v528 = vpop.f32.mrf.mxu0
        %v529 = vadd.f32 %v403, %v528
        %530 = vmatmul.bf16.gmra.mxu0 %v415
        %v531 = vpop.f32.mrf.mxu0
        %v532 = vadd.f32 %v403, %v531
        %v533 = vpop.f32.mrf.mxu0
        %v534 = vadd.f32 %v403, %v533
        %535 = vdwg.mxu0
        %v536 = vmax.f32 %v508, 0.0
        %v537 = vmax.f32 %v527, 0.0
        %v538 = vmax.f32 %v510, 0.0
        %v539 = vmax.f32 %v529, 0.0
        %v540 = vmax.f32 %v513, 0.0
        %v541 = vmax.f32 %v532, 0.0
        %v542 = vmax.f32 %v515, 0.0
        %v543 = vmax.f32 %v534, 0.0
        %v544 = vpack.c.bf16 %v538, %v536
        %v545 = vpack.c.bf16 %v539, %v537
        %v546 = vpack.c.bf16 %v542, %v540
        %v547 = vpack.c.bf16 %v543, %v541
        %v548 = vld [vmem:[#allocation8] sm:$0xff]
        %v549 = vld [vmem:[#allocation8 + $0x8] sm:$0xff]
        %v550 = vld [vmem:[#allocation8 + $0x10] sm:$0xff]
        %v551 = vld [vmem:[#allocation8 + $0x18] sm:$0xff]
        %v552 = vld [vmem:[#allocation8 + $0x20] sm:$0xff]
        %v553 = vld [vmem:[#allocation8 + $0x28] sm:$0xff]
        %v554 = vld [vmem:[#allocation8 + $0x30] sm:$0xff]
        %v555 = vld [vmem:[#allocation8 + $0x38] sm:$0xff]
        %v556 = vld [vmem:[#allocation8 + $0x40] sm:$0xff]
        %v557 = vld [vmem:[#allocation8 + $0x48] sm:$0xff]
        %v558 = vld [vmem:[#allocation8 + $0x50] sm:$0xff]
        %v559 = vld [vmem:[#allocation8 + $0x58] sm:$0xff]
        %v560 = vld [vmem:[#allocation8 + $0x60] sm:$0xff]
        %v561 = vld [vmem:[#allocation8 + $0x68] sm:$0xff]
        %v562 = vld [vmem:[#allocation8 + $0x70] sm:$0xff]
        %v563 = vld [vmem:[#allocation8 + $0x78] sm:$0xff]
        %v564 = vld [vmem:[#allocation8 + $0x80] sm:$0xff]
        %v565 = vld [vmem:[#allocation8 + $0x88] sm:$0xff]
        %v566 = vld [vmem:[#allocation8 + $0x90] sm:$0xff]
        %v567 = vld [vmem:[#allocation8 + $0x98] sm:$0xff]
        %v568 = vld [vmem:[#allocation8 + $0xa0] sm:$0xff]
        %v569 = vld [vmem:[#allocation8 + $0xa8] sm:$0xff]
        %v570 = vld [vmem:[#allocation8 + $0xb0] sm:$0xff]
        %v571 = vld [vmem:[#allocation8 + $0xb8] sm:$0xff]
        %v572 = vld [vmem:[#allocation8 + $0xc0] sm:$0xff]
        %v573 = vld [vmem:[#allocation8 + $0xc8] sm:$0xff]
        %v574 = vld [vmem:[#allocation8 + $0xd0] sm:$0xff]
        %v575 = vld [vmem:[#allocation8 + $0xd8] sm:$0xff]
        %v576 = vld [vmem:[#allocation8 + $0xe0] sm:$0xff]
        %v577 = vld [vmem:[#allocation8 + $0xe8] sm:$0xff]
        %v578 = vld [vmem:[#allocation8 + $0xf0] sm:$0xff]
        %v579 = vld [vmem:[#allocation8 + $0xf8] sm:$0xff]
        %v580 = vld [vmem:[%s4] sm:$0x3]
        %v582 = vperm.slane %v580, 0
        %v583 = vperm.slane %v580, 1
        %v618 = vunpack.c.l.b16 %v548
        %v619 = vunpack.c.h.b16 %v548
        %v620 = vunpack.c.l.b16 %v549
        %v621 = vunpack.c.h.b16 %v549
        %v622 = vunpack.c.l.b16 %v550
        %v623 = vunpack.c.h.b16 %v550
        %v624 = vunpack.c.l.b16 %v551
        %v625 = vunpack.c.h.b16 %v551
        %v626 = vunpack.c.l.b16 %v552
        %v627 = vunpack.c.h.b16 %v552
        %v628 = vunpack.c.l.b16 %v553
        %v629 = vunpack.c.h.b16 %v553
        %v630 = vunpack.c.l.b16 %v554
        %v631 = vunpack.c.h.b16 %v554
        %v632 = vunpack.c.l.b16 %v555
        %v633 = vunpack.c.h.b16 %v555
        %v634 = vunpack.c.l.b16 %v556
        %v635 = vunpack.c.h.b16 %v556
        %v636 = vunpack.c.l.b16 %v557
        %v637 = vunpack.c.h.b16 %v557
        %v638 = vunpack.c.l.b16 %v558
        %v639 = vunpack.c.h.b16 %v558
        %v640 = vunpack.c.l.b16 %v559
        %v641 = vunpack.c.h.b16 %v559
        %v642 = vunpack.c.l.b16 %v560
        %v643 = vunpack.c.h.b16 %v560
        %v644 = vunpack.c.l.b16 %v561
        %v645 = vunpack.c.h.b16 %v561
        %v646 = vunpack.c.l.b16 %v562
        %v647 = vunpack.c.h.b16 %v562
        %v648 = vunpack.c.l.b16 %v563
        %v649 = vunpack.c.h.b16 %v563
        %v650 = vunpack.c.l.b16 %v564
        %v651 = vunpack.c.h.b16 %v564
        %v652 = vunpack.c.l.b16 %v565
        %v653 = vunpack.c.h.b16 %v565
        %v654 = vunpack.c.l.b16 %v566
        %v655 = vunpack.c.h.b16 %v566
        %v656 = vunpack.c.l.b16 %v567
        %v657 = vunpack.c.h.b16 %v567
        %v658 = vunpack.c.l.b16 %v568
        %v659 = vunpack.c.h.b16 %v568
        %v660 = vunpack.c.l.b16 %v569
        %v661 = vunpack.c.h.b16 %v569
        %v662 = vunpack.c.l.b16 %v570
        %v663 = vunpack.c.h.b16 %v570
        %v664 = vunpack.c.l.b16 %v571
        %v665 = vunpack.c.h.b16 %v571
        %v666 = vunpack.c.l.b16 %v572
        %v667 = vunpack.c.h.b16 %v572
        %v668 = vunpack.c.l.b16 %v573
        %v669 = vunpack.c.h.b16 %v573
        %v670 = vunpack.c.l.b16 %v574
        %v671 = vunpack.c.h.b16 %v574
        %v672 = vunpack.c.l.b16 %v575
        %v673 = vunpack.c.h.b16 %v575
        %v674 = vunpack.c.l.b16 %v576
        %v675 = vunpack.c.h.b16 %v576
        %v676 = vunpack.c.l.b16 %v577
        %v677 = vunpack.c.h.b16 %v577
        %v678 = vunpack.c.l.b16 %v578
        %v679 = vunpack.c.h.b16 %v578
        %v680 = vunpack.c.l.b16 %v579
        %v681 = vunpack.c.h.b16 %v579
        %v682 = vpack.c.b16 %v620, %v618
        %v683 = vpack.c.b16 %v621, %v619
        %v684 = vpack.c.b16 %v624, %v622
        %v685 = vpack.c.b16 %v625, %v623
        %v686 = vpack.c.b16 %v628, %v626
        %v687 = vpack.c.b16 %v629, %v627
        %v688 = vpack.c.b16 %v632, %v630
        %v689 = vpack.c.b16 %v633, %v631
        %v690 = vpack.c.b16 %v636, %v634
        %v691 = vpack.c.b16 %v637, %v635
        %v692 = vpack.c.b16 %v640, %v638
        %v693 = vpack.c.b16 %v641, %v639
        %v694 = vpack.c.b16 %v644, %v642
        %v695 = vpack.c.b16 %v645, %v643
        %v696 = vpack.c.b16 %v648, %v646
        %v697 = vpack.c.b16 %v649, %v647
        %v698 = vpack.c.b16 %v652, %v650
        %v699 = vpack.c.b16 %v653, %v651
        %v700 = vpack.c.b16 %v656, %v654
        %v701 = vpack.c.b16 %v657, %v655
        %v702 = vpack.c.b16 %v660, %v658
        %v703 = vpack.c.b16 %v661, %v659
        %v704 = vpack.c.b16 %v664, %v662
        %v705 = vpack.c.b16 %v665, %v663
        %v706 = vpack.c.b16 %v668, %v666
        %v707 = vpack.c.b16 %v669, %v667
        %v708 = vpack.c.b16 %v672, %v670
        %v709 = vpack.c.b16 %v673, %v671
        %v710 = vpack.c.b16 %v676, %v674
        %v711 = vpack.c.b16 %v677, %v675
        %v712 = vpack.c.b16 %v680, %v678
        %v713 = vpack.c.b16 %v681, %v679
        %746 = vmatpush.bf16.msra.mxu0 %v696
        %747 = vmatpush.bf16.msra.mxu0 %v694
        %748 = vmatpush.bf16.msra.mxu0 %v692
        %749 = vmatpush.bf16.msra.mxu0 %v690
        %750 = vmatpush.bf16.msra.mxu0 %v688
        %751 = vmatpush.bf16.msra.mxu0 %v686
        %752 = vmatpush.bf16.msra.mxu0 %v684
        %753 = vmatpush.bf16.msra.mxu0 %v682
        %754 = vmatmul.bf16.gmra.mxu0 %v544
        %v755 = vpop.f32.mrf.mxu0
        %v756 = vadd.f32 %v582, %v755
        %v757 = vpop.f32.mrf.mxu0
        %v758 = vadd.f32 %v582, %v757
        %759 = vmatmul.bf16.gmra.mxu0 %v546
        %v760 = vpop.f32.mrf.mxu0
        %v761 = vadd.f32 %v582, %v760
        %v762 = vpop.f32.mrf.mxu0
        %v763 = vadd.f32 %v582, %v762
        %764 = vdwg.mxu0
        %765 = vmatpush.bf16.msra.mxu0 %v712
        %766 = vmatpush.bf16.msra.mxu0 %v710
        %767 = vmatpush.bf16.msra.mxu0 %v708
        %768 = vmatpush.bf16.msra.mxu0 %v706
        %769 = vmatpush.bf16.msra.mxu0 %v704
        %770 = vmatpush.bf16.msra.mxu0 %v702
        %771 = vmatpush.bf16.msra.mxu0 %v700
        %772 = vmatpush.bf16.msra.mxu0 %v698
        %773 = vmatmul.bf16.gmra.mxu0 %v545
        %v774 = vpop.f32.mrf.mxu0
        %v775 = vadd.f32 %v756, %v774
        %v776 = vpop.f32.mrf.mxu0
        %v777 = vadd.f32 %v758, %v776
        %778 = vmatmul.bf16.gmra.mxu0 %v547
        %v779 = vpop.f32.mrf.mxu0
        %v780 = vadd.f32 %v761, %v779
        %v781 = vpop.f32.mrf.mxu0
        %v782 = vadd.f32 %v763, %v781
        %783 = vdwg.mxu0
        %784 = vmatpush.bf16.msra.mxu0 %v697
        %785 = vmatpush.bf16.msra.mxu0 %v695
        %786 = vmatpush.bf16.msra.mxu0 %v693
        %787 = vmatpush.bf16.msra.mxu0 %v691
        %788 = vmatpush.bf16.msra.mxu0 %v689
        %789 = vmatpush.bf16.msra.mxu0 %v687
        %790 = vmatpush.bf16.msra.mxu0 %v685
        %791 = vmatpush.bf16.msra.mxu0 %v683
        %792 = vmatmul.bf16.gmra.mxu0 %v544
        %v793 = vpop.f32.mrf.mxu0
        %v794 = vadd.f32 %v583, %v793
        %v795 = vpop.f32.mrf.mxu0
        %v796 = vadd.f32 %v583, %v795
        %797 = vmatmul.bf16.gmra.mxu0 %v546
        %v798 = vpop.f32.mrf.mxu0
        %v799 = vadd.f32 %v583, %v798
        %v800 = vpop.f32.mrf.mxu0
        %v801 = vadd.f32 %v583, %v800
        %802 = vdwg.mxu0
        %803 = vmatpush.bf16.msra.mxu0 %v713
        %804 = vmatpush.bf16.msra.mxu0 %v711
        %805 = vmatpush.bf16.msra.mxu0 %v709
        %806 = vmatpush.bf16.msra.mxu0 %v707
        %807 = vmatpush.bf16.msra.mxu0 %v705
        %808 = vmatpush.bf16.msra.mxu0 %v703
        %809 = vmatpush.bf16.msra.mxu0 %v701
        %810 = vmatpush.bf16.msra.mxu0 %v699
        %811 = vmatmul.bf16.gmra.mxu0 %v545
        %v812 = vpop.f32.mrf.mxu0
        %v813 = vadd.f32 %v794, %v812
        %v814 = vpop.f32.mrf.mxu0
        %v815 = vadd.f32 %v796, %v814
        %816 = vmatmul.bf16.gmra.mxu0 %v547
        %v817 = vpop.f32.mrf.mxu0
        %v818 = vadd.f32 %v799, %v817
        %v819 = vpop.f32.mrf.mxu0
        %v820 = vadd.f32 %v801, %v819
        %821 = vdwg.mxu0
        %v822 = vmax.f32 %v775, 0.0
        %v823 = vmax.f32 %v813, 0.0
        %v824 = vmax.f32 %v777, 0.0
        %v825 = vmax.f32 %v815, 0.0
        %v826 = vmax.f32 %v780, 0.0
        %v827 = vmax.f32 %v818, 0.0
        %v828 = vmax.f32 %v782, 0.0
        %v829 = vmax.f32 %v820, 0.0
        %v830 = vpack.c.bf16 %v824, %v822
        %v831 = vpack.c.bf16 %v825, %v823
        %v832 = vpack.c.bf16 %v828, %v826
        %v833 = vpack.c.bf16 %v829, %v827
        %v834 = vld [vmem:[#allocation10] sm:$0xff]
        %v835 = vld [vmem:[#allocation10 + $0x8] sm:$0xff]
        %v836 = vld [vmem:[#allocation10 + $0x10] sm:$0xff]
        %v837 = vld [vmem:[#allocation10 + $0x18] sm:$0xf]
        %v838 = vld [vmem:[#allocation10 + $0x1c] sm:$0xff]
        %v839 = vld [vmem:[#allocation10 + $0x24] sm:$0xff]
        %v840 = vld [vmem:[#allocation10 + $0x2c] sm:$0xff]
        %v841 = vld [vmem:[#allocation10 + $0x34] sm:$0xf]
        %v842 = vld [vmem:[#allocation10 + $0x38] sm:$0xff]
        %v843 = vld [vmem:[#allocation10 + $0x40] sm:$0xff]
        %v844 = vld [vmem:[#allocation10 + $0x48] sm:$0xff]
        %v845 = vld [vmem:[#allocation10 + $0x50] sm:$0xf]
        %v846 = vld [vmem:[#allocation10 + $0x54] sm:$0xff]
        %v847 = vld [vmem:[#allocation10 + $0x5c] sm:$0xff]
        %v848 = vld [vmem:[#allocation10 + $0x64] sm:$0xff]
        %v849 = vld [vmem:[#allocation10 + $0x6c] sm:$0xf]
        %v850 = vld [vmem:[#allocation10 + $0x70] sm:$0xff]
        %v851 = vld [vmem:[#allocation10 + $0x78] sm:$0xff]
        %v852 = vld [vmem:[#allocation10 + $0x80] sm:$0xff]
        %v853 = vld [vmem:[#allocation10 + $0x88] sm:$0xf]
        %v854 = vld [vmem:[#allocation10 + $0x8c] sm:$0xff]
        %v855 = vld [vmem:[#allocation10 + $0x94] sm:$0xff]
        %v856 = vld [vmem:[#allocation10 + $0x9c] sm:$0xff]
        %v857 = vld [vmem:[#allocation10 + $0xa4] sm:$0xf]
        %v858 = vld [vmem:[#allocation10 + $0xa8] sm:$0xff]
        %v859 = vld [vmem:[#allocation10 + $0xb0] sm:$0xff]
        %v860 = vld [vmem:[#allocation10 + $0xb8] sm:$0xff]
        %v861 = vld [vmem:[#allocation10 + $0xc0] sm:$0xf]
        %v862 = vld [vmem:[#allocation10 + $0xc4] sm:$0xff]
        %v863 = vld [vmem:[#allocation10 + $0xcc] sm:$0xff]
        %v864 = vld [vmem:[#allocation10 + $0xd4] sm:$0xff]
        %v865 = vld [vmem:[#allocation10 + $0xdc] sm:$0xf]
        %v866 = vld [vmem:[#allocation10 + $0xe0] sm:$0xff]
        %v867 = vld [vmem:[#allocation10 + $0xe8] sm:$0xff]
        %v868 = vld [vmem:[#allocation10 + $0xf0] sm:$0xff]
        %v869 = vld [vmem:[#allocation10 + $0xf8] sm:$0xf]
        %v870 = vld [vmem:[#allocation10 + $0xfc] sm:$0xff]
        %v871 = vld [vmem:[#allocation10 + $0x104] sm:$0xff]
        %v872 = vld [vmem:[#allocation10 + $0x10c] sm:$0xff]
        %v873 = vld [vmem:[#allocation10 + $0x114] sm:$0xf]
        %v874 = vld [vmem:[#allocation10 + $0x118] sm:$0xff]
        %v875 = vld [vmem:[#allocation10 + $0x120] sm:$0xff]
        %v876 = vld [vmem:[#allocation10 + $0x128] sm:$0xff]
        %v877 = vld [vmem:[#allocation10 + $0x130] sm:$0xf]
        %v878 = vld [vmem:[#allocation10 + $0x134] sm:$0xff]
        %v879 = vld [vmem:[#allocation10 + $0x13c] sm:$0xff]
        %v880 = vld [vmem:[#allocation10 + $0x144] sm:$0xff]
        %v881 = vld [vmem:[#allocation10 + $0x14c] sm:$0xf]
        %v882 = vld [vmem:[#allocation10 + $0x150] sm:$0xff]
        %v883 = vld [vmem:[#allocation10 + $0x158] sm:$0xff]
        %v884 = vld [vmem:[#allocation10 + $0x160] sm:$0xff]
        %v885 = vld [vmem:[#allocation10 + $0x168] sm:$0xf]
        %v886 = vld [vmem:[#allocation10 + $0x16c] sm:$0xff]
        %v887 = vld [vmem:[#allocation10 + $0x174] sm:$0xff]
        %v888 = vld [vmem:[#allocation10 + $0x17c] sm:$0xff]
        %v889 = vld [vmem:[#allocation10 + $0x184] sm:$0xf]
        %v890 = vld [vmem:[#allocation10 + $0x188] sm:$0xff]
        %v891 = vld [vmem:[#allocation10 + $0x190] sm:$0xff]
        %v892 = vld [vmem:[#allocation10 + $0x198] sm:$0xff]
        %v893 = vld [vmem:[#allocation10 + $0x1a0] sm:$0xf]
        %v894 = vld [vmem:[#allocation10 + $0x1a4] sm:$0xff]
        %v895 = vld [vmem:[#allocation10 + $0x1ac] sm:$0xff]
        %v896 = vld [vmem:[#allocation10 + $0x1b4] sm:$0xff]
        %v897 = vld [vmem:[#allocation10 + $0x1bc] sm:$0xf]
        %v898 = vld [vmem:[#allocation10 + $0x1c0] sm:$0xff]
        %v899 = vld [vmem:[#allocation10 + $0x1c8] sm:$0xff]
        %v900 = vld [vmem:[#allocation10 + $0x1d0] sm:$0xff]
        %v901 = vld [vmem:[#allocation10 + $0x1d8] sm:$0xf]
        %v902 = vld [vmem:[#allocation10 + $0x1dc] sm:$0xff]
        %v903 = vld [vmem:[#allocation10 + $0x1e4] sm:$0xff]
        %v904 = vld [vmem:[#allocation10 + $0x1ec] sm:$0xff]
        %v905 = vld [vmem:[#allocation10 + $0x1f4] sm:$0xf]
        %v906 = vld [vmem:[#allocation10 + $0x1f8] sm:$0xff]
        %v907 = vld [vmem:[#allocation10 + $0x200] sm:$0xff]
        %v908 = vld [vmem:[#allocation10 + $0x208] sm:$0xff]
        %v909 = vld [vmem:[#allocation10 + $0x210] sm:$0xf]
        %v910 = vld [vmem:[#allocation10 + $0x214] sm:$0xff]
        %v911 = vld [vmem:[#allocation10 + $0x21c] sm:$0xff]
        %v912 = vld [vmem:[#allocation10 + $0x224] sm:$0xff]
        %v913 = vld [vmem:[#allocation10 + $0x22c] sm:$0xf]
        %v914 = vld [vmem:[#allocation10 + $0x230] sm:$0xff]
        %v915 = vld [vmem:[#allocation10 + $0x238] sm:$0xff]
        %v916 = vld [vmem:[#allocation10 + $0x240] sm:$0xff]
        %v917 = vld [vmem:[#allocation10 + $0x248] sm:$0xf]
        %v918 = vld [vmem:[#allocation10 + $0x24c] sm:$0xff]
        %v919 = vld [vmem:[#allocation10 + $0x254] sm:$0xff]
        %v920 = vld [vmem:[#allocation10 + $0x25c] sm:$0xff]
        %v921 = vld [vmem:[#allocation10 + $0x264] sm:$0xf]
        %v922 = vld [vmem:[#allocation10 + $0x268] sm:$0xff]
        %v923 = vld [vmem:[#allocation10 + $0x270] sm:$0xff]
        %v924 = vld [vmem:[#allocation10 + $0x278] sm:$0xff]
        %v925 = vld [vmem:[#allocation10 + $0x280] sm:$0xf]
        %v926 = vld [vmem:[#allocation10 + $0x284] sm:$0xff]
        %v927 = vld [vmem:[#allocation10 + $0x28c] sm:$0xff]
        %v928 = vld [vmem:[#allocation10 + $0x294] sm:$0xff]
        %v929 = vld [vmem:[#allocation10 + $0x29c] sm:$0xf]
        %v930 = vld [vmem:[#allocation10 + $0x2a0] sm:$0xff]
        %v931 = vld [vmem:[#allocation10 + $0x2a8] sm:$0xff]
        %v932 = vld [vmem:[#allocation10 + $0x2b0] sm:$0xff]
        %v933 = vld [vmem:[#allocation10 + $0x2b8] sm:$0xf]
        %v934 = vld [vmem:[#allocation10 + $0x2bc] sm:$0xff]
        %v935 = vld [vmem:[#allocation10 + $0x2c4] sm:$0xff]
        %v936 = vld [vmem:[#allocation10 + $0x2cc] sm:$0xff]
        %v937 = vld [vmem:[#allocation10 + $0x2d4] sm:$0xf]
        %v938 = vld [vmem:[#allocation10 + $0x2d8] sm:$0xff]
        %v939 = vld [vmem:[#allocation10 + $0x2e0] sm:$0xff]
        %v940 = vld [vmem:[#allocation10 + $0x2e8] sm:$0xff]
        %v941 = vld [vmem:[#allocation10 + $0x2f0] sm:$0xf]
        %v942 = vld [vmem:[#allocation10 + $0x2f4] sm:$0xff]
        %v943 = vld [vmem:[#allocation10 + $0x2fc] sm:$0xff]
        %v944 = vld [vmem:[#allocation10 + $0x304] sm:$0xff]
        %v945 = vld [vmem:[#allocation10 + $0x30c] sm:$0xf]
        %v946 = vld [vmem:[#allocation10 + $0x310] sm:$0xff]
        %v947 = vld [vmem:[#allocation10 + $0x318] sm:$0xff]
        %v948 = vld [vmem:[#allocation10 + $0x320] sm:$0xff]
        %v949 = vld [vmem:[#allocation10 + $0x328] sm:$0xf]
        %v950 = vld [vmem:[#allocation10 + $0x32c] sm:$0xff]
        %v951 = vld [vmem:[#allocation10 + $0x334] sm:$0xff]
        %v952 = vld [vmem:[#allocation10 + $0x33c] sm:$0xff]
        %v953 = vld [vmem:[#allocation10 + $0x344] sm:$0xf]
        %v954 = vld [vmem:[#allocation10 + $0x348] sm:$0xff]
        %v955 = vld [vmem:[#allocation10 + $0x350] sm:$0xff]
        %v956 = vld [vmem:[#allocation10 + $0x358] sm:$0xff]
        %v957 = vld [vmem:[#allocation10 + $0x360] sm:$0xf]
        %v958 = vld [vmem:[#allocation10 + $0x364] sm:$0xff]
        %v959 = vld [vmem:[#allocation10 + $0x36c] sm:$0xff]
        %v960 = vld [vmem:[#allocation10 + $0x374] sm:$0xff]
        %v961 = vld [vmem:[#allocation10 + $0x37c] sm:$0xf]
        %v962 = vld [vmem:[#allocation11] sm:$0xff]
        %v964 = vperm.slane %v962, 0
        %v965 = vperm.slane %v962, 1
        %v966 = vperm.slane %v962, 2
        %v967 = vperm.slane %v962, 3
        %v968 = vperm.slane %v962, 4
        %v969 = vperm.slane %v962, 5
        %v970 = vperm.slane %v962, 6
        %v1106 = vunpack.c.l.b16 %v834
        %v1107 = vunpack.c.h.b16 %v834
        %v1108 = vunpack.c.l.b16 %v835
        %v1109 = vunpack.c.h.b16 %v835
        %v1110 = vunpack.c.l.b16 %v836
        %v1111 = vunpack.c.h.b16 %v836
        %v1112 = vunpack.c.l.b16 %v837
        %v1113 = vunpack.c.l.b16 %v838
        %v1114 = vunpack.c.h.b16 %v838
        %v1115 = vunpack.c.l.b16 %v839
        %v1116 = vunpack.c.h.b16 %v839
        %v1117 = vunpack.c.l.b16 %v840
        %v1118 = vunpack.c.h.b16 %v840
        %v1119 = vunpack.c.l.b16 %v841
        %v1120 = vunpack.c.l.b16 %v842
        %v1121 = vunpack.c.h.b16 %v842
        %v1122 = vunpack.c.l.b16 %v843
        %v1123 = vunpack.c.h.b16 %v843
        %v1124 = vunpack.c.l.b16 %v844
        %v1125 = vunpack.c.h.b16 %v844
        %v1126 = vunpack.c.l.b16 %v845
        %v1127 = vunpack.c.l.b16 %v846
        %v1128 = vunpack.c.h.b16 %v846
        %v1129 = vunpack.c.l.b16 %v847
        %v1130 = vunpack.c.h.b16 %v847
        %v1131 = vunpack.c.l.b16 %v848
        %v1132 = vunpack.c.h.b16 %v848
        %v1133 = vunpack.c.l.b16 %v849
        %v1134 = vunpack.c.l.b16 %v850
        %v1135 = vunpack.c.h.b16 %v850
        %v1136 = vunpack.c.l.b16 %v851
        %v1137 = vunpack.c.h.b16 %v851
        %v1138 = vunpack.c.l.b16 %v852
        %v1139 = vunpack.c.h.b16 %v852
        %v1140 = vunpack.c.l.b16 %v853
        %v1141 = vunpack.c.l.b16 %v854
        %v1142 = vunpack.c.h.b16 %v854
        %v1143 = vunpack.c.l.b16 %v855
        %v1144 = vunpack.c.h.b16 %v855
        %v1145 = vunpack.c.l.b16 %v856
        %v1146 = vunpack.c.h.b16 %v856
        %v1147 = vunpack.c.l.b16 %v857
        %v1148 = vunpack.c.l.b16 %v858
        %v1149 = vunpack.c.h.b16 %v858
        %v1150 = vunpack.c.l.b16 %v859
        %v1151 = vunpack.c.h.b16 %v859
        %v1152 = vunpack.c.l.b16 %v860
        %v1153 = vunpack.c.h.b16 %v860
        %v1154 = vunpack.c.l.b16 %v861
        %v1155 = vunpack.c.l.b16 %v862
        %v1156 = vunpack.c.h.b16 %v862
        %v1157 = vunpack.c.l.b16 %v863
        %v1158 = vunpack.c.h.b16 %v863
        %v1159 = vunpack.c.l.b16 %v864
        %v1160 = vunpack.c.h.b16 %v864
        %v1161 = vunpack.c.l.b16 %v865
        %v1162 = vunpack.c.l.b16 %v866
        %v1163 = vunpack.c.h.b16 %v866
        %v1164 = vunpack.c.l.b16 %v867
        %v1165 = vunpack.c.h.b16 %v867
        %v1166 = vunpack.c.l.b16 %v868
        %v1167 = vunpack.c.h.b16 %v868
        %v1168 = vunpack.c.l.b16 %v869
        %v1169 = vunpack.c.l.b16 %v870
        %v1170 = vunpack.c.h.b16 %v870
        %v1171 = vunpack.c.l.b16 %v871
        %v1172 = vunpack.c.h.b16 %v871
        %v1173 = vunpack.c.l.b16 %v872
        %v1174 = vunpack.c.h.b16 %v872
        %v1175 = vunpack.c.l.b16 %v873
        %v1176 = vunpack.c.l.b16 %v874
        %v1177 = vunpack.c.h.b16 %v874
        %v1178 = vunpack.c.l.b16 %v875
        %v1179 = vunpack.c.h.b16 %v875
        %v1180 = vunpack.c.l.b16 %v876
        %v1181 = vunpack.c.h.b16 %v876
        %v1182 = vunpack.c.l.b16 %v877
        %v1183 = vunpack.c.l.b16 %v878
        %v1184 = vunpack.c.h.b16 %v878
        %v1185 = vunpack.c.l.b16 %v879
        %v1186 = vunpack.c.h.b16 %v879
        %v1187 = vunpack.c.l.b16 %v880
        %v1188 = vunpack.c.h.b16 %v880
        %v1189 = vunpack.c.l.b16 %v881
        %v1190 = vunpack.c.l.b16 %v882
        %v1191 = vunpack.c.h.b16 %v882
        %v1192 = vunpack.c.l.b16 %v883
        %v1193 = vunpack.c.h.b16 %v883
        %v1194 = vunpack.c.l.b16 %v884
        %v1195 = vunpack.c.h.b16 %v884
        %v1196 = vunpack.c.l.b16 %v885
        %v1197 = vunpack.c.l.b16 %v886
        %v1198 = vunpack.c.h.b16 %v886
        %v1199 = vunpack.c.l.b16 %v887
        %v1200 = vunpack.c.h.b16 %v887
        %v1201 = vunpack.c.l.b16 %v888
        %v1202 = vunpack.c.h.b16 %v888
        %v1203 = vunpack.c.l.b16 %v889
        %v1204 = vunpack.c.l.b16 %v890
        %v1205 = vunpack.c.h.b16 %v890
        %v1206 = vunpack.c.l.b16 %v891
        %v1207 = vunpack.c.h.b16 %v891
        %v1208 = vunpack.c.l.b16 %v892
        %v1209 = vunpack.c.h.b16 %v892
        %v1210 = vunpack.c.l.b16 %v893
        %v1211 = vunpack.c.l.b16 %v894
        %v1212 = vunpack.c.h.b16 %v894
        %v1213 = vunpack.c.l.b16 %v895
        %v1214 = vunpack.c.h.b16 %v895
        %v1215 = vunpack.c.l.b16 %v896
        %v1216 = vunpack.c.h.b16 %v896
        %v1217 = vunpack.c.l.b16 %v897
        %v1218 = vunpack.c.l.b16 %v898
        %v1219 = vunpack.c.h.b16 %v898
        %v1220 = vunpack.c.l.b16 %v899
        %v1221 = vunpack.c.h.b16 %v899
        %v1222 = vunpack.c.l.b16 %v900
        %v1223 = vunpack.c.h.b16 %v900
        %v1224 = vunpack.c.l.b16 %v901
        %v1225 = vunpack.c.l.b16 %v902
        %v1226 = vunpack.c.h.b16 %v902
        %v1227 = vunpack.c.l.b16 %v903
        %v1228 = vunpack.c.h.b16 %v903
        %v1229 = vunpack.c.l.b16 %v904
        %v1230 = vunpack.c.h.b16 %v904
        %v1231 = vunpack.c.l.b16 %v905
        %v1232 = vunpack.c.l.b16 %v906
        %v1233 = vunpack.c.h.b16 %v906
        %v1234 = vunpack.c.l.b16 %v907
        %v1235 = vunpack.c.h.b16 %v907
        %v1236 = vunpack.c.l.b16 %v908
        %v1237 = vunpack.c.h.b16 %v908
        %v1238 = vunpack.c.l.b16 %v909
        %v1239 = vunpack.c.l.b16 %v910
        %v1240 = vunpack.c.h.b16 %v910
        %v1241 = vunpack.c.l.b16 %v911
        %v1242 = vunpack.c.h.b16 %v911
        %v1243 = vunpack.c.l.b16 %v912
        %v1244 = vunpack.c.h.b16 %v912
        %v1245 = vunpack.c.l.b16 %v913
        %v1246 = vunpack.c.l.b16 %v914
        %v1247 = vunpack.c.h.b16 %v914
        %v1248 = vunpack.c.l.b16 %v915
        %v1249 = vunpack.c.h.b16 %v915
        %v1250 = vunpack.c.l.b16 %v916
        %v1251 = vunpack.c.h.b16 %v916
        %v1252 = vunpack.c.l.b16 %v917
        %v1253 = vunpack.c.l.b16 %v918
        %v1254 = vunpack.c.h.b16 %v918
        %v1255 = vunpack.c.l.b16 %v919
        %v1256 = vunpack.c.h.b16 %v919
        %v1257 = vunpack.c.l.b16 %v920
        %v1258 = vunpack.c.h.b16 %v920
        %v1259 = vunpack.c.l.b16 %v921
        %v1260 = vunpack.c.l.b16 %v922
        %v1261 = vunpack.c.h.b16 %v922
        %v1262 = vunpack.c.l.b16 %v923
        %v1263 = vunpack.c.h.b16 %v923
        %v1264 = vunpack.c.l.b16 %v924
        %v1265 = vunpack.c.h.b16 %v924
        %v1266 = vunpack.c.l.b16 %v925
        %v1267 = vunpack.c.l.b16 %v926
        %v1268 = vunpack.c.h.b16 %v926
        %v1269 = vunpack.c.l.b16 %v927
        %v1270 = vunpack.c.h.b16 %v927
        %v1271 = vunpack.c.l.b16 %v928
        %v1272 = vunpack.c.h.b16 %v928
        %v1273 = vunpack.c.l.b16 %v929
        %v1274 = vunpack.c.l.b16 %v930
        %v1275 = vunpack.c.h.b16 %v930
        %v1276 = vunpack.c.l.b16 %v931
        %v1277 = vunpack.c.h.b16 %v931
        %v1278 = vunpack.c.l.b16 %v932
        %v1279 = vunpack.c.h.b16 %v932
        %v1280 = vunpack.c.l.b16 %v933
        %v1281 = vunpack.c.l.b16 %v934
        %v1282 = vunpack.c.h.b16 %v934
        %v1283 = vunpack.c.l.b16 %v935
        %v1284 = vunpack.c.h.b16 %v935
        %v1285 = vunpack.c.l.b16 %v936
        %v1286 = vunpack.c.h.b16 %v936
        %v1287 = vunpack.c.l.b16 %v937
        %v1288 = vunpack.c.l.b16 %v938
        %v1289 = vunpack.c.h.b16 %v938
        %v1290 = vunpack.c.l.b16 %v939
        %v1291 = vunpack.c.h.b16 %v939
        %v1292 = vunpack.c.l.b16 %v940
        %v1293 = vunpack.c.h.b16 %v940
        %v1294 = vunpack.c.l.b16 %v941
        %v1295 = vunpack.c.l.b16 %v942
        %v1296 = vunpack.c.h.b16 %v942
        %v1297 = vunpack.c.l.b16 %v943
        %v1298 = vunpack.c.h.b16 %v943
        %v1299 = vunpack.c.l.b16 %v944
        %v1300 = vunpack.c.h.b16 %v944
        %v1301 = vunpack.c.l.b16 %v945
        %v1302 = vunpack.c.l.b16 %v946
        %v1303 = vunpack.c.h.b16 %v946
        %v1304 = vunpack.c.l.b16 %v947
        %v1305 = vunpack.c.h.b16 %v947
        %v1306 = vunpack.c.l.b16 %v948
        %v1307 = vunpack.c.h.b16 %v948
        %v1308 = vunpack.c.l.b16 %v949
        %v1309 = vunpack.c.l.b16 %v950
        %v1310 = vunpack.c.h.b16 %v950
        %v1311 = vunpack.c.l.b16 %v951
        %v1312 = vunpack.c.h.b16 %v951
        %v1313 = vunpack.c.l.b16 %v952
        %v1314 = vunpack.c.h.b16 %v952
        %v1315 = vunpack.c.l.b16 %v953
        %v1316 = vunpack.c.l.b16 %v954
        %v1317 = vunpack.c.h.b16 %v954
        %v1318 = vunpack.c.l.b16 %v955
        %v1319 = vunpack.c.h.b16 %v955
        %v1320 = vunpack.c.l.b16 %v956
        %v1321 = vunpack.c.h.b16 %v956
        %v1322 = vunpack.c.l.b16 %v957
        %v1323 = vunpack.c.l.b16 %v958
        %v1324 = vunpack.c.h.b16 %v958
        %v1325 = vunpack.c.l.b16 %v959
        %v1326 = vunpack.c.h.b16 %v959
        %v1327 = vunpack.c.l.b16 %v960
        %v1328 = vunpack.c.h.b16 %v960
        %v1329 = vunpack.c.l.b16 %v961
        %v1330 = vpack.c.b16 %v1113, %v1106
        %v1331 = vpack.c.b16 %v1114, %v1107
        %v1332 = vpack.c.b16 %v1115, %v1108
        %v1333 = vpack.c.b16 %v1116, %v1109
        %v1334 = vpack.c.b16 %v1117, %v1110
        %v1335 = vpack.c.b16 %v1118, %v1111
        %v1336 = vpack.c.b16 %v1119, %v1112
        %v1337 = vpack.c.b16 %v1127, %v1120
        %v1338 = vpack.c.b16 %v1128, %v1121
        %v1339 = vpack.c.b16 %v1129, %v1122
        %v1340 = vpack.c.b16 %v1130, %v1123
        %v1341 = vpack.c.b16 %v1131, %v1124
        %v1342 = vpack.c.b16 %v1132, %v1125
        %v1343 = vpack.c.b16 %v1133, %v1126
        %v1344 = vpack.c.b16 %v1141, %v1134
        %v1345 = vpack.c.b16 %v1142, %v1135
        %v1346 = vpack.c.b16 %v1143, %v1136
        %v1347 = vpack.c.b16 %v1144, %v1137
        %v1348 = vpack.c.b16 %v1145, %v1138
        %v1349 = vpack.c.b16 %v1146, %v1139
        %v1350 = vpack.c.b16 %v1147, %v1140
        %v1351 = vpack.c.b16 %v1155, %v1148
        %v1352 = vpack.c.b16 %v1156, %v1149
        %v1353 = vpack.c.b16 %v1157, %v1150
        %v1354 = vpack.c.b16 %v1158, %v1151
        %v1355 = vpack.c.b16 %v1159, %v1152
        %v1356 = vpack.c.b16 %v1160, %v1153
        %v1357 = vpack.c.b16 %v1161, %v1154
        %v1358 = vpack.c.b16 %v1169, %v1162
        %v1359 = vpack.c.b16 %v1170, %v1163
        %v1360 = vpack.c.b16 %v1171, %v1164
        %v1361 = vpack.c.b16 %v1172, %v1165
        %v1362 = vpack.c.b16 %v1173, %v1166
        %v1363 = vpack.c.b16 %v1174, %v1167
        %v1364 = vpack.c.b16 %v1175, %v1168
        %v1365 = vpack.c.b16 %v1183, %v1176
        %v1366 = vpack.c.b16 %v1184, %v1177
        %v1367 = vpack.c.b16 %v1185, %v1178
        %v1368 = vpack.c.b16 %v1186, %v1179
        %v1369 = vpack.c.b16 %v1187, %v1180
        %v1370 = vpack.c.b16 %v1188, %v1181
        %v1371 = vpack.c.b16 %v1189, %v1182
        %v1372 = vpack.c.b16 %v1197, %v1190
        %v1373 = vpack.c.b16 %v1198, %v1191
        %v1374 = vpack.c.b16 %v1199, %v1192
        %v1375 = vpack.c.b16 %v1200, %v1193
        %v1376 = vpack.c.b16 %v1201, %v1194
        %v1377 = vpack.c.b16 %v1202, %v1195
        %v1378 = vpack.c.b16 %v1203, %v1196
        %v1379 = vpack.c.b16 %v1211, %v1204
        %v1380 = vpack.c.b16 %v1212, %v1205
        %v1381 = vpack.c.b16 %v1213, %v1206
        %v1382 = vpack.c.b16 %v1214, %v1207
        %v1383 = vpack.c.b16 %v1215, %v1208
        %v1384 = vpack.c.b16 %v1216, %v1209
        %v1385 = vpack.c.b16 %v1217, %v1210
        %v1386 = vpack.c.b16 %v1225, %v1218
        %v1387 = vpack.c.b16 %v1226, %v1219
        %v1388 = vpack.c.b16 %v1227, %v1220
        %v1389 = vpack.c.b16 %v1228, %v1221
        %v1390 = vpack.c.b16 %v1229, %v1222
        %v1391 = vpack.c.b16 %v1230, %v1223
        %v1392 = vpack.c.b16 %v1231, %v1224
        %v1393 = vpack.c.b16 %v1239, %v1232
        %v1394 = vpack.c.b16 %v1240, %v1233
        %v1395 = vpack.c.b16 %v1241, %v1234
        %v1396 = vpack.c.b16 %v1242, %v1235
        %v1397 = vpack.c.b16 %v1243, %v1236
        %v1398 = vpack.c.b16 %v1244, %v1237
        %v1399 = vpack.c.b16 %v1245, %v1238
        %v1400 = vpack.c.b16 %v1253, %v1246
        %v1401 = vpack.c.b16 %v1254, %v1247
        %v1402 = vpack.c.b16 %v1255, %v1248
        %v1403 = vpack.c.b16 %v1256, %v1249
        %v1404 = vpack.c.b16 %v1257, %v1250
        %v1405 = vpack.c.b16 %v1258, %v1251
        %v1406 = vpack.c.b16 %v1259, %v1252
        %v1407 = vpack.c.b16 %v1267, %v1260
        %v1408 = vpack.c.b16 %v1268, %v1261
        %v1409 = vpack.c.b16 %v1269, %v1262
        %v1410 = vpack.c.b16 %v1270, %v1263
        %v1411 = vpack.c.b16 %v1271, %v1264
        %v1412 = vpack.c.b16 %v1272, %v1265
        %v1413 = vpack.c.b16 %v1273, %v1266
        %v1414 = vpack.c.b16 %v1281, %v1274
        %v1415 = vpack.c.b16 %v1282, %v1275
        %v1416 = vpack.c.b16 %v1283, %v1276
        %v1417 = vpack.c.b16 %v1284, %v1277
        %v1418 = vpack.c.b16 %v1285, %v1278
        %v1419 = vpack.c.b16 %v1286, %v1279
        %v1420 = vpack.c.b16 %v1287, %v1280
        %v1421 = vpack.c.b16 %v1295, %v1288
        %v1422 = vpack.c.b16 %v1296, %v1289
        %v1423 = vpack.c.b16 %v1297, %v1290
        %v1424 = vpack.c.b16 %v1298, %v1291
        %v1425 = vpack.c.b16 %v1299, %v1292
        %v1426 = vpack.c.b16 %v1300, %v1293
        %v1427 = vpack.c.b16 %v1301, %v1294
        %v1428 = vpack.c.b16 %v1309, %v1302
        %v1429 = vpack.c.b16 %v1310, %v1303
        %v1430 = vpack.c.b16 %v1311, %v1304
        %v1431 = vpack.c.b16 %v1312, %v1305
        %v1432 = vpack.c.b16 %v1313, %v1306
        %v1433 = vpack.c.b16 %v1314, %v1307
        %v1434 = vpack.c.b16 %v1315, %v1308
        %v1435 = vpack.c.b16 %v1323, %v1316
        %v1436 = vpack.c.b16 %v1324, %v1317
        %v1437 = vpack.c.b16 %v1325, %v1318
        %v1438 = vpack.c.b16 %v1326, %v1319
        %v1439 = vpack.c.b16 %v1327, %v1320
        %v1440 = vpack.c.b16 %v1328, %v1321
        %v1441 = vpack.c.b16 %v1329, %v1322
        %1554 = vmatpush.bf16.msra.mxu0 %v1379
        %1555 = vmatpush.bf16.msra.mxu0 %v1372
        %1556 = vmatpush.bf16.msra.mxu0 %v1365
        %1557 = vmatpush.bf16.msra.mxu0 %v1358
        %1558 = vmatpush.bf16.msra.mxu0 %v1351
        %1559 = vmatpush.bf16.msra.mxu0 %v1344
        %1560 = vmatpush.bf16.msra.mxu0 %v1337
        %1561 = vmatpush.bf16.msra.mxu0 %v1330
        %1562 = vmatmul.bf16.gmra.mxu0 %v830
        %v1563 = vpop.f32.mrf.mxu0
        %v1564 = vadd.f32 %v964, %v1563
        %v1565 = vpop.f32.mrf.mxu0
        %v1566 = vadd.f32 %v964, %v1565
        %1567 = vmatmul.bf16.gmra.mxu0 %v832
        %v1568 = vpop.f32.mrf.mxu0
        %v1569 = vadd.f32 %v964, %v1568
        %v1570 = vpop.f32.mrf.mxu0
        %v1571 = vadd.f32 %v964, %v1570
        %1572 = vdwg.mxu0
        %1573 = vmatpush.bf16.msra.mxu0 %v1435
        %1574 = vmatpush.bf16.msra.mxu0 %v1428
        %1575 = vmatpush.bf16.msra.mxu0 %v1421
        %1576 = vmatpush.bf16.msra.mxu0 %v1414
        %1577 = vmatpush.bf16.msra.mxu0 %v1407
        %1578 = vmatpush.bf16.msra.mxu0 %v1400
        %1579 = vmatpush.bf16.msra.mxu0 %v1393
        %1580 = vmatpush.bf16.msra.mxu0 %v1386
        %1581 = vmatmul.bf16.gmra.mxu0 %v831
        %v1582 = vpop.f32.mrf.mxu0
        %v1583 = vadd.f32 %v1564, %v1582
        %v1584 = vpop.f32.mrf.mxu0
        %v1585 = vadd.f32 %v1566, %v1584
        %1586 = vmatmul.bf16.gmra.mxu0 %v833
        %v1587 = vpop.f32.mrf.mxu0
        %v1588 = vadd.f32 %v1569, %v1587
        %v1589 = vpop.f32.mrf.mxu0
        %v1590 = vadd.f32 %v1571, %v1589
        %1591 = vdwg.mxu0
        %1592 = vmatpush.bf16.msra.mxu0 %v1380
        %1593 = vmatpush.bf16.msra.mxu0 %v1373
        %1594 = vmatpush.bf16.msra.mxu0 %v1366
        %1595 = vmatpush.bf16.msra.mxu0 %v1359
        %1596 = vmatpush.bf16.msra.mxu0 %v1352
        %1597 = vmatpush.bf16.msra.mxu0 %v1345
        %1598 = vmatpush.bf16.msra.mxu0 %v1338
        %1599 = vmatpush.bf16.msra.mxu0 %v1331
        %1600 = vmatmul.bf16.gmra.mxu0 %v830
        %v1601 = vpop.f32.mrf.mxu0
        %v1602 = vadd.f32 %v965, %v1601
        %v1603 = vpop.f32.mrf.mxu0
        %v1604 = vadd.f32 %v965, %v1603
        %1605 = vmatmul.bf16.gmra.mxu0 %v832
        %v1606 = vpop.f32.mrf.mxu0
        %v1607 = vadd.f32 %v965, %v1606
        %v1608 = vpop.f32.mrf.mxu0
        %v1609 = vadd.f32 %v965, %v1608
        %1610 = vdwg.mxu0
        %1611 = vmatpush.bf16.msra.mxu0 %v1436
        %1612 = vmatpush.bf16.msra.mxu0 %v1429
        %1613 = vmatpush.bf16.msra.mxu0 %v1422
        %1614 = vmatpush.bf16.msra.mxu0 %v1415
        %1615 = vmatpush.bf16.msra.mxu0 %v1408
        %1616 = vmatpush.bf16.msra.mxu0 %v1401
        %1617 = vmatpush.bf16.msra.mxu0 %v1394
        %1618 = vmatpush.bf16.msra.mxu0 %v1387
        %1619 = vmatmul.bf16.gmra.mxu0 %v831
        %v1620 = vpop.f32.mrf.mxu0
        %v1621 = vadd.f32 %v1602, %v1620
        %v1622 = vpop.f32.mrf.mxu0
        %v1623 = vadd.f32 %v1604, %v1622
        %1624 = vmatmul.bf16.gmra.mxu0 %v833
        %v1625 = vpop.f32.mrf.mxu0
        %v1626 = vadd.f32 %v1607, %v1625
        %v1627 = vpop.f32.mrf.mxu0
        %v1628 = vadd.f32 %v1609, %v1627
        %1629 = vdwg.mxu0
        %1630 = vmatpush.bf16.msra.mxu0 %v1381
        %1631 = vmatpush.bf16.msra.mxu0 %v1374
        %1632 = vmatpush.bf16.msra.mxu0 %v1367
        %1633 = vmatpush.bf16.msra.mxu0 %v1360
        %1634 = vmatpush.bf16.msra.mxu0 %v1353
        %1635 = vmatpush.bf16.msra.mxu0 %v1346
        %1636 = vmatpush.bf16.msra.mxu0 %v1339
        %1637 = vmatpush.bf16.msra.mxu0 %v1332
        %1638 = vmatmul.bf16.gmra.mxu0 %v830
        %v1639 = vpop.f32.mrf.mxu0
        %v1640 = vadd.f32 %v966, %v1639
        %v1641 = vpop.f32.mrf.mxu0
        %v1642 = vadd.f32 %v966, %v1641
        %1643 = vmatmul.bf16.gmra.mxu0 %v832
        %v1644 = vpop.f32.mrf.mxu0
        %v1645 = vadd.f32 %v966, %v1644
        %v1646 = vpop.f32.mrf.mxu0
        %v1647 = vadd.f32 %v966, %v1646
        %1648 = vdwg.mxu0
        %1649 = vmatpush.bf16.msra.mxu0 %v1437
        %1650 = vmatpush.bf16.msra.mxu0 %v1430
        %1651 = vmatpush.bf16.msra.mxu0 %v1423
        %1652 = vmatpush.bf16.msra.mxu0 %v1416
        %1653 = vmatpush.bf16.msra.mxu0 %v1409
        %1654 = vmatpush.bf16.msra.mxu0 %v1402
        %1655 = vmatpush.bf16.msra.mxu0 %v1395
        %1656 = vmatpush.bf16.msra.mxu0 %v1388
        %1657 = vmatmul.bf16.gmra.mxu0 %v831
        %v1658 = vpop.f32.mrf.mxu0
        %v1659 = vadd.f32 %v1640, %v1658
        %v1660 = vpop.f32.mrf.mxu0
        %v1661 = vadd.f32 %v1642, %v1660
        %1662 = vmatmul.bf16.gmra.mxu0 %v833
        %v1663 = vpop.f32.mrf.mxu0
        %v1664 = vadd.f32 %v1645, %v1663
        %v1665 = vpop.f32.mrf.mxu0
        %v1666 = vadd.f32 %v1647, %v1665
        %1667 = vdwg.mxu0
        %1668 = vmatpush.bf16.msra.mxu0 %v1382
        %1669 = vmatpush.bf16.msra.mxu0 %v1375
        %1670 = vmatpush.bf16.msra.mxu0 %v1368
        %1671 = vmatpush.bf16.msra.mxu0 %v1361
        %1672 = vmatpush.bf16.msra.mxu0 %v1354
        %1673 = vmatpush.bf16.msra.mxu0 %v1347
        %1674 = vmatpush.bf16.msra.mxu0 %v1340
        %1675 = vmatpush.bf16.msra.mxu0 %v1333
        %1676 = vmatmul.bf16.gmra.mxu0 %v830
        %v1677 = vpop.f32.mrf.mxu0
        %v1678 = vadd.f32 %v967, %v1677
        %v1679 = vpop.f32.mrf.mxu0
        %v1680 = vadd.f32 %v967, %v1679
        %1681 = vmatmul.bf16.gmra.mxu0 %v832
        %v1682 = vpop.f32.mrf.mxu0
        %v1683 = vadd.f32 %v967, %v1682
        %v1684 = vpop.f32.mrf.mxu0
        %v1685 = vadd.f32 %v967, %v1684
        %1686 = vdwg.mxu0
        %1687 = vmatpush.bf16.msra.mxu0 %v1438
        %1688 = vmatpush.bf16.msra.mxu0 %v1431
        %1689 = vmatpush.bf16.msra.mxu0 %v1424
        %1690 = vmatpush.bf16.msra.mxu0 %v1417
        %1691 = vmatpush.bf16.msra.mxu0 %v1410
        %1692 = vmatpush.bf16.msra.mxu0 %v1403
        %1693 = vmatpush.bf16.msra.mxu0 %v1396
        %1694 = vmatpush.bf16.msra.mxu0 %v1389
        %1695 = vmatmul.bf16.gmra.mxu0 %v831
        %v1696 = vpop.f32.mrf.mxu0
        %v1697 = vadd.f32 %v1678, %v1696
        %v1698 = vpop.f32.mrf.mxu0
        %v1699 = vadd.f32 %v1680, %v1698
        %1700 = vmatmul.bf16.gmra.mxu0 %v833
        %v1701 = vpop.f32.mrf.mxu0
        %v1702 = vadd.f32 %v1683, %v1701
        %v1703 = vpop.f32.mrf.mxu0
        %v1704 = vadd.f32 %v1685, %v1703
        %1705 = vdwg.mxu0
        %1706 = vmatpush.bf16.msra.mxu0 %v1383
        %1707 = vmatpush.bf16.msra.mxu0 %v1376
        %1708 = vmatpush.bf16.msra.mxu0 %v1369
        %1709 = vmatpush.bf16.msra.mxu0 %v1362
        %1710 = vmatpush.bf16.msra.mxu0 %v1355
        %1711 = vmatpush.bf16.msra.mxu0 %v1348
        %1712 = vmatpush.bf16.msra.mxu0 %v1341
        %1713 = vmatpush.bf16.msra.mxu0 %v1334
        %1714 = vmatmul.bf16.gmra.mxu0 %v830
        %v1715 = vpop.f32.mrf.mxu0
        %v1716 = vadd.f32 %v968, %v1715
        %v1717 = vpop.f32.mrf.mxu0
        %v1718 = vadd.f32 %v968, %v1717
        %1719 = vmatmul.bf16.gmra.mxu0 %v832
        %v1720 = vpop.f32.mrf.mxu0
        %v1721 = vadd.f32 %v968, %v1720
        %v1722 = vpop.f32.mrf.mxu0
        %v1723 = vadd.f32 %v968, %v1722
        %1724 = vdwg.mxu0
        %1725 = vmatpush.bf16.msra.mxu0 %v1439
        %1726 = vmatpush.bf16.msra.mxu0 %v1432
        %1727 = vmatpush.bf16.msra.mxu0 %v1425
        %1728 = vmatpush.bf16.msra.mxu0 %v1418
        %1729 = vmatpush.bf16.msra.mxu0 %v1411
        %1730 = vmatpush.bf16.msra.mxu0 %v1404
        %1731 = vmatpush.bf16.msra.mxu0 %v1397
        %1732 = vmatpush.bf16.msra.mxu0 %v1390
        %1733 = vmatmul.bf16.gmra.mxu0 %v831
        %v1734 = vpop.f32.mrf.mxu0
        %v1735 = vadd.f32 %v1716, %v1734
        %v1736 = vpop.f32.mrf.mxu0
        %v1737 = vadd.f32 %v1718, %v1736
        %1738 = vmatmul.bf16.gmra.mxu0 %v833
        %v1739 = vpop.f32.mrf.mxu0
        %v1740 = vadd.f32 %v1721, %v1739
        %v1741 = vpop.f32.mrf.mxu0
        %v1742 = vadd.f32 %v1723, %v1741
        %1743 = vdwg.mxu0
        %1744 = vmatpush.bf16.msra.mxu0 %v1384
        %1745 = vmatpush.bf16.msra.mxu0 %v1377
        %1746 = vmatpush.bf16.msra.mxu0 %v1370
        %1747 = vmatpush.bf16.msra.mxu0 %v1363
        %1748 = vmatpush.bf16.msra.mxu0 %v1356
        %1749 = vmatpush.bf16.msra.mxu0 %v1349
        %1750 = vmatpush.bf16.msra.mxu0 %v1342
        %1751 = vmatpush.bf16.msra.mxu0 %v1335
        %1752 = vmatmul.bf16.gmra.mxu0 %v830
        %v1753 = vpop.f32.mrf.mxu0
        %v1754 = vadd.f32 %v969, %v1753
        %v1755 = vpop.f32.mrf.mxu0
        %v1756 = vadd.f32 %v969, %v1755
        %1757 = vmatmul.bf16.gmra.mxu0 %v832
        %v1758 = vpop.f32.mrf.mxu0
        %v1759 = vadd.f32 %v969, %v1758
        %v1760 = vpop.f32.mrf.mxu0
        %v1761 = vadd.f32 %v969, %v1760
        %1762 = vdwg.mxu0
        %1763 = vmatpush.bf16.msra.mxu0 %v1440
        %1764 = vmatpush.bf16.msra.mxu0 %v1433
        %1765 = vmatpush.bf16.msra.mxu0 %v1426
        %1766 = vmatpush.bf16.msra.mxu0 %v1419
        %1767 = vmatpush.bf16.msra.mxu0 %v1412
        %1768 = vmatpush.bf16.msra.mxu0 %v1405
        %1769 = vmatpush.bf16.msra.mxu0 %v1398
        %1770 = vmatpush.bf16.msra.mxu0 %v1391
        %1771 = vmatmul.bf16.gmra.mxu0 %v831
        %v1772 = vpop.f32.mrf.mxu0
        %v1773 = vadd.f32 %v1754, %v1772
        %v1774 = vpop.f32.mrf.mxu0
        %v1775 = vadd.f32 %v1756, %v1774
        %1776 = vmatmul.bf16.gmra.mxu0 %v833
        %v1777 = vpop.f32.mrf.mxu0
        %v1778 = vadd.f32 %v1759, %v1777
        %v1779 = vpop.f32.mrf.mxu0
        %v1780 = vadd.f32 %v1761, %v1779
        %1781 = vdwg.mxu0
        %1782 = vmatpush.bf16.msra.mxu0 %v1385
        %1783 = vmatpush.bf16.msra.mxu0 %v1378
        %1784 = vmatpush.bf16.msra.mxu0 %v1371
        %1785 = vmatpush.bf16.msra.mxu0 %v1364
        %1786 = vmatpush.bf16.msra.mxu0 %v1357
        %1787 = vmatpush.bf16.msra.mxu0 %v1350
        %1788 = vmatpush.bf16.msra.mxu0 %v1343
        %1789 = vmatpush.bf16.msra.mxu0 %v1336
        %1790 = vmatmul.bf16.gmra.mxu0 %v830
        %v1791 = vpop.f32.mrf.mxu0
        %v1792 = vadd.f32 %v970, %v1791
        %v1793 = vpop.f32.mrf.mxu0
        %v1794 = vadd.f32 %v970, %v1793
        %1795 = vmatmul.bf16.gmra.mxu0 %v832
        %v1796 = vpop.f32.mrf.mxu0
        %v1797 = vadd.f32 %v970, %v1796
        %v1798 = vpop.f32.mrf.mxu0
        %v1799 = vadd.f32 %v970, %v1798
        %1800 = vdwg.mxu0
        %1801 = vmatpush.bf16.msra.mxu0 %v1441
        %1802 = vmatpush.bf16.msra.mxu0 %v1434
        %1803 = vmatpush.bf16.msra.mxu0 %v1427
        %1804 = vmatpush.bf16.msra.mxu0 %v1420
        %1805 = vmatpush.bf16.msra.mxu0 %v1413
        %1806 = vmatpush.bf16.msra.mxu0 %v1406
        %1807 = vmatpush.bf16.msra.mxu0 %v1399
        %1808 = vmatpush.bf16.msra.mxu0 %v1392
        %1809 = vmatmul.bf16.gmra.mxu0 %v831
        %v1810 = vpop.f32.mrf.mxu0
        %v1811 = vadd.f32 %v1792, %v1810
        %v1812 = vpop.f32.mrf.mxu0
        %v1813 = vadd.f32 %v1794, %v1812
        %1814 = vmatmul.bf16.gmra.mxu0 %v833
        %v1815 = vpop.f32.mrf.mxu0
        %v1816 = vadd.f32 %v1797, %v1815
        %v1817 = vpop.f32.mrf.mxu0
        %v1818 = vadd.f32 %v1799, %v1817
        %1819 = vdwg.mxu0
        %v1820 = vtanh.pop %v1583
        %v1821 = vtanh.pop %v1621
        %v1822 = vtanh.pop %v1659
        %v1823 = vtanh.pop %v1697
        %v1824 = vtanh.pop %v1735
        %v1825 = vtanh.pop %v1773
        %v1826 = vtanh.pop %v1811
        %v1827 = vtanh.pop %v1585
        %v1828 = vtanh.pop %v1623
        %v1829 = vtanh.pop %v1661
        %v1830 = vtanh.pop %v1699
        %v1831 = vtanh.pop %v1737
        %v1832 = vtanh.pop %v1775
        %v1833 = vtanh.pop %v1813
        %v1834 = vtanh.pop %v1588
        %v1835 = vtanh.pop %v1626
        %v1836 = vtanh.pop %v1664
        %v1837 = vtanh.pop %v1702
        %v1838 = vtanh.pop %v1740
        %v1839 = vtanh.pop %v1778
        %v1840 = vtanh.pop %v1816
        %v1841 = vtanh.pop %v1590
        %v1842 = vtanh.pop %v1628
        %v1843 = vtanh.pop %v1666
        %v1844 = vtanh.pop %v1704
        %v1845 = vtanh.pop %v1742
        %v1846 = vtanh.pop %v1780
        %v1847 = vtanh.pop %v1818
        %1848 = vst [vmem:[%s377] sm:$0xff] %v1820
        %1849 = vst [vmem:[%s377 + $0x8] sm:$0xff] %v1821
        %1850 = vst [vmem:[%s377 + $0x10] sm:$0xff] %v1822
        %1851 = vst [vmem:[%s377 + $0x18] sm:$0xff] %v1823
        %1852 = vst [vmem:[%s377 + $0x20] sm:$0xff] %v1824
        %1853 = vst [vmem:[%s377 + $0x28] sm:$0xff] %v1825
        %vm1854 = vcmask 130048
        %1855 = vst.msk [vmem:[%s377 + $0x30] sm:$0xff] %vm1854, %v1826
        %1856 = vst [vmem:[%s377 + $0x38] sm:$0xff] %v1827
        %1857 = vst [vmem:[%s377 + $0x40] sm:$0xff] %v1828
        %1858 = vst [vmem:[%s377 + $0x48] sm:$0xff] %v1829
        %1859 = vst [vmem:[%s377 + $0x50] sm:$0xff] %v1830
        %1860 = vst [vmem:[%s377 + $0x58] sm:$0xff] %v1831
        %1861 = vst [vmem:[%s377 + $0x60] sm:$0xff] %v1832
        %1862 = vst.msk [vmem:[%s377 + $0x68] sm:$0xff] %vm1854, %v1833
        %1863 = vst [vmem:[%s377 + $0x70] sm:$0xff] %v1834
        %1864 = vst [vmem:[%s377 + $0x78] sm:$0xff] %v1835
        %1865 = vst [vmem:[%s377 + $0x80] sm:$0xff] %v1836
        %1866 = vst [vmem:[%s377 + $0x88] sm:$0xff] %v1837
        %1867 = vst [vmem:[%s377 + $0x90] sm:$0xff] %v1838
        %1868 = vst [vmem:[%s377 + $0x98] sm:$0xff] %v1839
        %1869 = vst.msk [vmem:[%s377 + $0xa0] sm:$0xff] %vm1854, %v1840
        %1870 = vst [vmem:[%s377 + $0xa8] sm:$0xff] %v1841
        %1871 = vst [vmem:[%s377 + $0xb0] sm:$0xff] %v1842
        %1872 = vst [vmem:[%s377 + $0xb8] sm:$0xff] %v1843
        %1873 = vst [vmem:[%s377 + $0xc0] sm:$0xff] %v1844
        %1874 = vst [vmem:[%s377 + $0xc8] sm:$0xff] %v1845
        %1875 = vst [vmem:[%s377 + $0xd0] sm:$0xff] %v1846
        %1876 = vst.msk [vmem:[%s377 + $0xd8] sm:$0xff] %vm1854, %v1847
        %s1877 = sand.u32 %s187, 1
        %s1878 = scalar_lea.sflag [#allocation4], %s1877
        %s1879 = sand.u32 %s187, 1
        %s1880 = smul.addr %s1879, 224
        %s1881 = scalar_lea.vmem [#allocation13], %s1880
        // Predicated region
        $region73: #{tpu_custom_call.1} parent=47 // pred_check
          %p1882 = pneg %p197
        $region74: #{tpu_custom_call.1} parent=47 // pred_check_branch
          %1884 = sbr.rel (%p1882) target = $region76
        $region75: #{tpu_custom_call.1} parent=47 // pred_region
          %s1885 = smul.u32 4, %s27
          %1887 = vsyncadd %s1878, 0
          %s1888 = smul.addr %s1885, 7
          %s1889 = smul.addr %s1888, 8
          %s1890 = scalar_lea.hbm %s7, %s1889
          %s1891 = sshll.u32 %s1881, 4
          %s1892 = int_to_ptr.vmem [resolvable:$true] %s1891
          %s1893 = sshll.u32 %s1890, 4
          %s1894 = int_to_ptr.hbm [resolvable:$true] %s1893
          %1899 = dma.vmem_to_hbm [thread:$0]  %s1892, 3584, %s1894, %s1878, 896, 896, 56
        $region76: #{tpu_custom_call.1} parent=47 // pred_fallthru
          _
      $region48: #{tpu_custom_call.1} parent=5 // pred_fallthru
        _
      %p1900 = scmp.le.s32.totalorder 2, %s22
      // Predicated region
      $region77: #{tpu_custom_call.1} parent=5 // pred_check
        %p1901 = pneg %p1900
      $region78: #{tpu_custom_call.1} parent=5 // pred_check_branch
        %1903 = sbr.rel (%p1901) target = $region80
      $region79: #{tpu_custom_call.1} parent=5 // pred_region
        %s1904 = ssub.s32 %s22, 2
        // Predicated region
        $region81: #{tpu_custom_call.1} parent=79 // pred_check
          %p1905 = pneg %p203
        $region82: #{tpu_custom_call.1} parent=79 // pred_check_branch
          %1907 = sbr.rel (%p1905) target = $region84
        $region83: #{tpu_custom_call.1} parent=79 // pred_region
          %s1908 = sand.u32 %s188, 1
          %s1909 = scalar_lea.sflag [#allocation4], %s1908
          %s1910 = sand.u32 %s188, 1
          %s1911 = smul.addr %s1910, 224
          %s1912 = scalar_lea.vmem [#allocation13], %s1911
          %1914 = dma.done %s1909, 3584
        $region84: #{tpu_custom_call.1} parent=79 // pred_fallthru
          _
      $region80: #{tpu_custom_call.1} parent=5 // pred_fallthru
        _
    $region6: #{tpu_custom_call.1} parent=1 // loop_footer
      %s26 = sadd.s32 1, %s22
    $region7: #{tpu_custom_call.1} parent=1 // loop_footer_branch
      %21 = sbr.rel target = $region3
    $region8: #{tpu_custom_call.1} parent=1 // loop_exit
      _
    %1915 = vsyncpa [#allocation3], 1
    %s1916 = scalar_lea.sflag [#allocation3], 1
    %1917 = vsyncpa %s1916, 1
    %1918 = vsyncpa [#allocation6], 1
    %1919 = vsyncpa [#allocation9], 1
    %1920 = vsyncpa [#allocation12], 1
    %1921 = vsyncpa [#allocation4], 1
    %s1922 = scalar_lea.sflag [#allocation4], 1
    %1923 = vsyncpa %s1922, 1

</llo_original>
